<compile_context>
chip_gen: v7x
topology: tpu7x:2x2x1
jax: 0.10.0
libtpu: 0.0.40
codegen_flags: <defaults>
</compile_context>

<pallas_src>
import jax
import jax.numpy as jnp
from jax import lax
from jax.experimental import pallas as pl
from jax.experimental.pallas import tpu as pltpu

# ----------------------------- model constants -----------------------------
EMBED_DIM = 128          # transformer_width == embed_dim (lane-dense)
PATCH = 8                # vision_patch_size
VOCAB = 64               # vocab_size (small synthetic vocab)
SEQ = 8                  # context_length
EPS = 1e-12              # guard for L2 normalization of zero rows


# ------------------------------- text kernel --------------------------------
def encode_text_pallas(text_ids, text_mask, tok_emb, pos_emb, proj):
    """text_ids/text_mask: [B, L] int32, tok_emb: [V, D], pos_emb: [L, D],
    proj: [D, D] -> sentence features [B, D] f32.  Fused gather + pool + proj."""
    B, L = text_ids.shape
    V, D = tok_emb.shape
    TB = B if B <= 256 else 256      # >=256-row matmuls on v6e/v7x when B allows

    def kernel(ids_ref, mask_ref, tok_ref, pos_ref, proj_ref, out_ref):
        ids = ids_ref[...]                                            # [TB, L] int32
        m = mask_ref[...].astype(jnp.float32)                         # [TB, L]
        mw = m / jnp.maximum(jnp.sum(m, axis=1, keepdims=True), 1.0)  # mask weights
        # Token-embedding gather as a mask-weighted one-hot matmul (VOCAB is small).
        # TODO(synk): for a production vocab (~49K) replace with an in-kernel DMA gather.
        vocab_iota = lax.broadcasted_iota(jnp.int32, (TB, L, V), 2)
        w_onehot = jnp.sum(
            jnp.where(ids[:, :, None] == vocab_iota, mw[:, :, None], 0.0), axis=1)  # [TB,V]
        pooled = jnp.dot(w_onehot, tok_ref[...], preferred_element_type=jnp.float32)
        pooled = pooled + jnp.dot(mw, pos_ref[...], preferred_element_type=jnp.float32)
        # TODO(synk): CLIP text transformer resblocks + ln_final not reproduced
        # (pretrained weights unavailable); masked mean-pool stands in.
        out_ref[...] = jnp.dot(pooled, proj_ref[...], preferred_element_type=jnp.float32)

    return pl.pallas_call(
        kernel,
        out_shape=jax.ShapeDtypeStruct((B, D), jnp.float32),
        grid=(pl.cdiv(B, TB),),
        in_specs=[
            pl.BlockSpec((TB, L), lambda i: (i, 0)),
            pl.BlockSpec((TB, L), lambda i: (i, 0)),
            pl.BlockSpec((V, D), lambda i: (0, 0)),
            pl.BlockSpec((L, D), lambda i: (0, 0)),
            pl.BlockSpec((D, D), lambda i: (0, 0)),
        ],
        out_specs=pl.BlockSpec((TB, D), lambda i: (i, 0)),
        compiler_params=pltpu.CompilerParams(dimension_semantics=("parallel",)),
    )(text_ids, text_mask, tok_emb, pos_emb, proj)


# ------------------------------- video kernel -------------------------------
def encode_video_pallas(vid_flat, w_full, w_proj, mw, b, n_v):
    """vid_flat: [b*n_v, K] f32 raw frames (channel-major flatten, no transpose),
    w_full: [K, D] bf16 spatially-tiled conv1 weight, w_proj: [D, D] f32,
    mw: [b*n_v, 1] f32 per-frame weight (frame mask-weight / npp) -> [b, D] f32."""
    BF, K = vid_flat.shape
    D = w_full.shape[1]
    TB = b if b <= 64 else 64        # batch rows per step (>=8 output sublanes when b allows)
    TF = TB * n_v                    # matmul M rows per step (frames collapsed)

    def kernel(vid_ref, wfull_ref, wproj_ref, mw_ref, out_ref):
        x = vid_ref[...].astype(jnp.bfloat16)                         # cast in VMEM only
        pe = jnp.dot(x, wfull_ref[...],
                     preferred_element_type=jnp.float32)              # [TF, D] (= npp*patch-mean)
        pew = pe * mw_ref[...]                                        # per-frame weights (incl 1/npp)
        # Block-diagonal frame pooling: pooled[t] = sum_v pew[t*n_v + v]
        r = lax.broadcasted_iota(jnp.int32, (TB, TF), 0)
        c = lax.broadcasted_iota(jnp.int32, (TB, TF), 1)
        S = jnp.where((c >= r * n_v) & (c < (r + 1) * n_v), 1.0, 0.0)  # [TB, TF]
        pooled = jnp.dot(S, pew, preferred_element_type=jnp.float32)   # [TB, D]
        # Visual projection hoisted out of the frame loop: one matmul per block.
        out_ref[...] = jnp.dot(pooled, wproj_ref[...],
                               preferred_element_type=jnp.float32)

    return pl.pallas_call(
        kernel,
        out_shape=jax.ShapeDtypeStruct((b, D), jnp.float32),
        grid=(pl.cdiv(b, TB),),
        in_specs=[
            pl.BlockSpec((TF, K), lambda i: (i, 0)),
            pl.BlockSpec((K, D), lambda i: (0, 0)),
            pl.BlockSpec((D, D), lambda i: (0, 0)),
            pl.BlockSpec((TF, 1), lambda i: (i, 0)),
        ],
        out_specs=pl.BlockSpec((TB, D), lambda i: (i, 0)),
        compiler_params=pltpu.CompilerParams(dimension_semantics=("parallel",)),
    )(vid_flat, w_full, w_proj, mw)


def encode_video(params, video, video_mask):
    b, n_v, c, h, w = video.shape
    hp, wp = h // PATCH, w // PATCH
    npp = hp * wp
    K = c * h * w
    # No patchify relayout: conv1 (kernel==stride) followed by the patch-mean is linear,
    # so tiling the conv weight over the spatial grid turns (patchify+embed+mean) into a
    # single matmul against the raw channel-major frame; video is read from HBM once.
    vid_flat = video.reshape(b * n_v, K)                              # pure reshape, stays f32
    w_patch = params["conv1_weight"].transpose(1, 2, 3, 0)            # [c, P, P, D]
    w_full = jnp.broadcast_to(
        w_patch[:, None, :, None, :, :], (c, hp, PATCH, wp, PATCH, EMBED_DIM)
    ).reshape(K, EMBED_DIM).astype(jnp.bfloat16)                      # tiny (K x 128)
    # TODO(synk): CLIP ViT transformer blocks / class token not reproduced (pretrained
    # submodules unavailable); per-frame feature is patch-mean -> visual projection.
    vm = video_mask.astype(jnp.float32)
    mw = vm / jnp.maximum(jnp.sum(vm, axis=1, keepdims=True), 1.0)    # meanP frame weights
    mw = (mw / float(npp)).reshape(b * n_v, 1)                        # fold patch-mean 1/npp
    return encode_video_pallas(vid_flat, w_full, params["visual_proj"], mw, b, n_v)


# --------------------------- similarity + loss kernel ------------------------
def _sim_loss_kernel(t_ref, v_ref, scale_ref, sims_ref, loss_ref):
    t = t_ref[...]
    v = v_ref[...]
    t = t * lax.rsqrt(jnp.sum(t * t, axis=-1, keepdims=True) + EPS)
    v = v * lax.rsqrt(jnp.sum(v * v, axis=-1, keepdims=True) + EPS)
    sims = lax.dot_general(t, v, (((1,), (1,)), ((), ())),
                           preferred_element_type=jnp.float32)        # t @ v.T
    sims_ref[...] = sims

    scale = scale_ref[0, 0]
    logits = sims * scale
    B = logits.shape[0]
    # One global max -> a single exp over [B,B] serves both CE directions.
    gmax = jnp.max(logits, keepdims=True)                             # [1, 1]
    e = jnp.exp(logits - gmax)
    lse_r = jnp.log(jnp.sum(e, axis=1, keepdims=True)) + gmax         # text -> video
    lse_c = jnp.log(jnp.sum(e, axis=0, keepdims=True)) + gmax         # video -> text
    # diag(sims) == rowwise <t_i, v_i> (Bt == Bv); no iota/where matrices.
    diag_sum = jnp.sum(t * v) * scale
    loss_ref[0, 0] = (jnp.sum(lse_r) + jnp.sum(lse_c) - 2.0 * diag_sum) / B


def sim_and_loss(text_feat, video_feat, logit_scale):
    Bt, D = text_feat.shape
    Bv = video_feat.shape[0]
    # TODO(synk): for post-allgather batches in the thousands, tile sims over
    # (Bt//tm, Bv//tn) with running log-sum-exp scratch (v7x has only 64 MiB VMEM).
    sims, loss = pl.pallas_call(
        _sim_loss_kernel,
        out_shape=(jax.ShapeDtypeStruct((Bt, Bv), jnp.float32),
                   jax.ShapeDtypeStruct((1, 1), jnp.float32)),
        grid=(1,),
        in_specs=[
            pl.BlockSpec((Bt, D), lambda i: (0, 0)),
            pl.BlockSpec((Bv, D), lambda i: (0, 0)),
            pl.BlockSpec(memory_space=pltpu.MemorySpace.SMEM),
        ],
        out_specs=(pl.BlockSpec((Bt, Bv), lambda i: (0, 0)),
                   pl.BlockSpec(memory_space=pltpu.MemorySpace.SMEM)),
        compiler_params=pltpu.CompilerParams(vmem_limit_bytes=32 * 1024 * 1024),
    )(text_feat, video_feat, logit_scale.reshape(1, 1))
    return sims, loss[0, 0]


# ------------------------------ parameter init ------------------------------
def init_params(key):
    ks = jax.random.split(key, 5)
    std = 0.02  # matches TIR_Model.init_weights: Normal(0, 0.02)
    return dict(
        token_embedding=std * jax.random.normal(ks[0], (VOCAB, EMBED_DIM), jnp.float32),
        positional_embedding=std * jax.random.normal(ks[1], (SEQ, EMBED_DIM), jnp.float32),
        text_projection=std * jax.random.normal(ks[2], (EMBED_DIM, EMBED_DIM), jnp.float32),
        conv1_weight=std * jax.random.normal(ks[3], (EMBED_DIM, 3, PATCH, PATCH), jnp.float32),
        visual_proj=std * jax.random.normal(ks[4], (EMBED_DIM, EMBED_DIM), jnp.float32),
        logit_scale=jnp.asarray(jnp.log(1.0 / 0.07), jnp.float32),  # CLIP init
    )


# --------------------------------- forward ----------------------------------
def tir_forward(params, text_ids, text_mask, video, video_mask):
    # mirrors TIR_Model.forward (training branch, single device)
    text_ids = text_ids.reshape(-1, text_ids.shape[-1])
    text_mask = text_mask.reshape(-1, text_mask.shape[-1])
    video_mask = video_mask.reshape(-1, video_mask.shape[-1])

    sentence_feat = encode_text_pallas(
        text_ids, text_mask, params["token_embedding"],
        params["positional_embedding"], params["text_projection"])
    video_feat = encode_video(params, video, video_mask)
    # word_feat / patch_feat feed only the undefined probabilistic heads; never materialized.

    logit_scale = jnp.minimum(jnp.exp(params["logit_scale"]), 100.0)
    similarity, sim_loss = sim_and_loss(sentence_feat, video_feat, logit_scale)
    # TODO(synk): LFA_Net / PER_Net probabilistic heads, dis_loss, KL_Divergence and the
    # distributed allgather are not defined in the provided source; not reproduced.
    loss = sim_loss
    return loss, similarity


# ----------------------------------- main ------------------------------------
if __name__ == "__main__":
    key = jax.random.PRNGKey(0)
    pkey, k1, k2 = jax.random.split(key, 3)
    params = init_params(pkey)

    b, n_v = 2, 4
    text_ids = jax.random.randint(k1, (b, SEQ), 0, VOCAB, dtype=jnp.int32)
    text_mask = jnp.ones((b, SEQ), jnp.int32)
    video = jax.random.normal(k2, (b, n_v, 3, 16, 16), jnp.float32)  # [b, n_v, C, H, W]
    video_mask = jnp.ones((b, n_v), jnp.int32)

    loss, sims = jax.jit(tir_forward)(params, text_ids, text_mask, video, video_mask)
    jax.block_until_ready((loss, sims))
    print("KERNEL_OK")
</pallas_src>

<mosaic_0001>
module attributes {stable_mosaic.version = 11 : i64} {
  func.func @kernel(%arg0: i32, %arg1: memref<8x768xf32, #tpu.memory_space<vmem>>, %arg2: memref<768x128xbf16, #tpu.memory_space<vmem>>, %arg3: memref<128x128xf32, #tpu.memory_space<vmem>>, %arg4: memref<8x1xf32, #tpu.memory_space<vmem>>, %arg5: memref<2x128xf32, #tpu.memory_space<vmem>>) attributes {dimension_semantics = [#tpu.dimension_semantics<parallel>], iteration_bounds = array<i64: 1>, scalar_prefetch = 0 : i64, scratch_operands = 0 : i64, tpu.core_type = #tpu.core_type<tc>, window_params = [{transform_indices = @transform_0, window_bounds = array<i64: 8, 768>}, {pipeline_mode = #tpu.pipeline_mode<synchronous>, transform_indices = @transform_1, window_bounds = array<i64: 768, 128>}, {pipeline_mode = #tpu.pipeline_mode<synchronous>, transform_indices = @transform_2, window_bounds = array<i64: 128, 128>}, {transform_indices = @transform_3, window_bounds = array<i64: 8, 1>}, {transform_indices = @transform_4, window_bounds = array<i64: 2, 128>}]} {
    %c0 = arith.constant 0 : index
    %c0_0 = arith.constant 0 : index
    %0 = vector.load %arg1[%c0, %c0_0] : memref<8x768xf32, #tpu.memory_space<vmem>>, vector<8x768xf32>
    %1 = arith.truncf %0 : vector<8x768xf32> to vector<8x768xbf16>
    %c0_1 = arith.constant 0 : index
    %c0_2 = arith.constant 0 : index
    %2 = vector.load %arg2[%c0_1, %c0_2] : memref<768x128xbf16, #tpu.memory_space<vmem>>, vector<768x128xbf16>
    %cst = arith.constant dense<0.000000e+00> : vector<8x128xf32>
    %3 = tpu.matmul %1, %2, %cst {dimension_numbers = #tpu.dot_dimension_numbers<[1], [0], [0], [1], [0, 0, 1, 1], [], []>} : vector<8x768xbf16>, vector<768x128xbf16>, vector<8x128xf32> -> vector<8x128xf32>
    %c0_3 = arith.constant 0 : index
    %c0_4 = arith.constant 0 : index
    %4 = vector.load %arg4[%c0_3, %c0_4] : memref<8x1xf32, #tpu.memory_space<vmem>>, vector<8x1xf32>
    %5 = vector.broadcast %4 : vector<8x1xf32> to vector<8x128xf32>
    %6 = arith.mulf %3, %5 : vector<8x128xf32>
    %7 = tpu.iota {dimensions = array<i32: 0>} : vector<2x8xi32>
    %8 = tpu.iota {dimensions = array<i32: 1>} : vector<2x8xi32>
    %c4_i32 = arith.constant 4 : i32
    %9 = vector.broadcast %c4_i32 : i32 to vector<2x8xi32>
    %10 = arith.muli %7, %9 : vector<2x8xi32>
    %11 = arith.cmpi sge, %8, %10 : vector<2x8xi32>
    %c1_i32 = arith.constant 1 : i32
    %12 = vector.broadcast %c1_i32 : i32 to vector<2x8xi32>
    %13 = arith.addi %7, %12 : vector<2x8xi32>
    %c4_i32_5 = arith.constant 4 : i32
    %14 = vector.broadcast %c4_i32_5 : i32 to vector<2x8xi32>
    %15 = arith.muli %13, %14 : vector<2x8xi32>
    %16 = arith.cmpi slt, %8, %15 : vector<2x8xi32>
    %17 = arith.andi %11, %16 : vector<2x8xi1>
    %cst_6 = arith.constant 1.000000e+00 : f32
    %cst_7 = arith.constant 0.000000e+00 : f32
    %18 = vector.broadcast %cst_6 : f32 to vector<2x8xf32>
    %19 = vector.broadcast %cst_7 : f32 to vector<2x8xf32>
    %20 = arith.select %17, %18, %19 : vector<2x8xi1>, vector<2x8xf32>
    %cst_8 = arith.constant dense<0.000000e+00> : vector<2x128xf32>
    %21 = tpu.matmul %20, %6, %cst_8 {dimension_numbers = #tpu.dot_dimension_numbers<[1], [0], [0], [1], [0, 0, 1, 1], [], []>} : vector<2x8xf32>, vector<8x128xf32>, vector<2x128xf32> -> vector<2x128xf32>
    %c0_9 = arith.constant 0 : index
    %c0_10 = arith.constant 0 : index
    %22 = vector.load %arg3[%c0_9, %c0_10] : memref<128x128xf32, #tpu.memory_space<vmem>>, vector<128x128xf32>
    %cst_11 = arith.constant dense<0.000000e+00> : vector<2x128xf32>
    %23 = tpu.matmul %21, %22, %cst_11 {dimension_numbers = #tpu.dot_dimension_numbers<[1], [0], [0], [1], [0, 0, 1, 1], [], []>} : vector<2x128xf32>, vector<128x128xf32>, vector<2x128xf32> -> vector<2x128xf32>
    %c0_12 = arith.constant 0 : index
    %c0_13 = arith.constant 0 : index
    %24 = vector.load %arg5[%c0_12, %c0_13] : memref<2x128xf32, #tpu.memory_space<vmem>>, vector<2x128xf32>
    tpu.vector_store %arg5[%c0_12, %c0_13], %23 {strides = array<i32>} : memref<2x128xf32, #tpu.memory_space<vmem>>, vector<2x128xf32>,
    return
  }
  func.func @transform_0(%arg0: i32) -> (i32, i32) {
    %c0_i32 = arith.constant 0 : i32
    %c0_i32_0 = arith.constant 0 : i32
    return %arg0, %c0_i32 : i32, i32
  }
  func.func @transform_1(%arg0: i32) -> (i32, i32) {
    %c0_i32 = arith.constant 0 : i32
    %c0_i32_0 = arith.constant 0 : i32
    %c0_i32_1 = arith.constant 0 : i32
    return %c0_i32, %c0_i32_0 : i32, i32
  }
  func.func @transform_2(%arg0: i32) -> (i32, i32) {
    %c0_i32 = arith.constant 0 : i32
    %c0_i32_0 = arith.constant 0 : i32
    %c0_i32_1 = arith.constant 0 : i32
    return %c0_i32, %c0_i32_0 : i32, i32
  }
  func.func @transform_3(%arg0: i32) -> (i32, i32) {
    %c0_i32 = arith.constant 0 : i32
    %c0_i32_0 = arith.constant 0 : i32
    return %arg0, %c0_i32 : i32, i32
  }
  func.func @transform_4(%arg0: i32) -> (i32, i32) {
    %c0_i32 = arith.constant 0 : i32
    %c0_i32_0 = arith.constant 0 : i32
    return %arg0, %c0_i32 : i32, i32
  }
}

module attributes {stable_mosaic.version = 11 : i64} {
  func.func @kernel(%arg0: i32, %arg1: memref<2x8xi32, #tpu.memory_space<vmem>>, %arg2: memref<2x8xi32, #tpu.memory_space<vmem>>, %arg3: memref<64x128xf32, #tpu.memory_space<vmem>>, %arg4: memref<8x128xf32, #tpu.memory_space<vmem>>, %arg5: memref<128x128xf32, #tpu.memory_space<vmem>>, %arg6: memref<2x128xf32, #tpu.memory_space<vmem>>) attributes {dimension_semantics = [#tpu.dimension_semantics<parallel>], iteration_bounds = array<i64: 1>, scalar_prefetch = 0 : i64, scratch_operands = 0 : i64, tpu.core_type = #tpu.core_type<tc>, window_params = [{transform_indices = @transform_0, window_bounds = array<i64: 2, 8>}, {transform_indices = @transform_1, window_bounds = array<i64: 2, 8>}, {pipeline_mode = #tpu.pipeline_mode<synchronous>, transform_indices = @transform_2, window_bounds = array<i64: 64, 128>}, {pipeline_mode = #tpu.pipeline_mode<synchronous>, transform_indices = @transform_3, window_bounds = array<i64: 8, 128>}, {pipeline_mode = #tpu.pipeline_mode<synchronous>, transform_indices = @transform_4, window_bounds = array<i64: 128, 128>}, {transform_indices = @transform_5, window_bounds = array<i64: 2, 128>}]} {
    %c0 = arith.constant 0 : index
    %c0_0 = arith.constant 0 : index
    %0 = vector.load %arg1[%c0, %c0_0] : memref<2x8xi32, #tpu.memory_space<vmem>>, vector<2x8xi32>
    %c0_1 = arith.constant 0 : index
    %c0_2 = arith.constant 0 : index
    %1 = vector.load %arg2[%c0_1, %c0_2] : memref<2x8xi32, #tpu.memory_space<vmem>>, vector<2x8xi32>
    %2 = arith.sitofp %1 : vector<2x8xi32> to vector<2x8xf32>
    %cst = arith.constant dense<0.000000e+00> : vector<2xf32>
    %3 = vector.multi_reduction <add>, %2, %cst [1] : vector<2x8xf32> to vector<2xf32>
    %4 = vector.shape_cast %3 : vector<2xf32> to vector<2x1xf32>
    %cst_3 = arith.constant 1.000000e+00 : f32
    %5 = vector.broadcast %cst_3 : f32 to vector<2x1xf32>
    %6 = arith.maximumf %4, %5 : vector<2x1xf32>
    %7 = vector.broadcast %6 : vector<2x1xf32> to vector<2x8xf32>
    %8 = arith.divf %2, %7 : vector<2x8xf32>
    %9 = tpu.iota {dimensions = array<i32: 2>} : vector<2x8x64xi32>
    %10 = vector.shape_cast %0 : vector<2x8xi32> to vector<2x8x1xi32>
    %11 = vector.broadcast %10 : vector<2x8x1xi32> to vector<2x8x64xi32>
    %12 = arith.cmpi eq, %11, %9 : vector<2x8x64xi32>
    %13 = vector.shape_cast %8 : vector<2x8xf32> to vector<2x8x1xf32>
    %cst_4 = arith.constant 0.000000e+00 : f32
    %14 = vector.shape_cast %13 : vector<2x8x1xf32> to vector<2x8x1xf32>
    %15 = vector.broadcast %14 : vector<2x8x1xf32> to vector<2x8x64xf32>
    %16 = vector.broadcast %cst_4 : f32 to vector<2x8x64xf32>
    %17 = arith.select %12, %15, %16 : vector<2x8x64xi1>, vector<2x8x64xf32>
    %cst_5 = arith.constant dense<0.000000e+00> : vector<2x64xf32>
    %18 = vector.multi_reduction <add>, %17, %cst_5 [1] : vector<2x8x64xf32> to vector<2x64xf32>
    %c0_6 = arith.constant 0 : index
    %c0_7 = arith.constant 0 : index
    %19 = vector.load %arg3[%c0_6, %c0_7] : memref<64x128xf32, #tpu.memory_space<vmem>>, vector<64x128xf32>
    %cst_8 = arith.constant dense<0.000000e+00> : vector<2x128xf32>
    %20 = tpu.matmul %18, %19, %cst_8 {dimension_numbers = #tpu.dot_dimension_numbers<[1], [0], [0], [1], [0, 0, 1, 1], [], []>} : vector<2x64xf32>, vector<64x128xf32>, vector<2x128xf32> -> vector<2x128xf32>
    %c0_9 = arith.constant 0 : index
    %c0_10 = arith.constant 0 : index
    %21 = vector.load %arg4[%c0_9, %c0_10] : memref<8x128xf32, #tpu.memory_space<vmem>>, vector<8x128xf32>
    %cst_11 = arith.constant dense<0.000000e+00> : vector<2x128xf32>
    %22 = tpu.matmul %8, %21, %cst_11 {dimension_numbers = #tpu.dot_dimension_numbers<[1], [0], [0], [1], [0, 0, 1, 1], [], []>} : vector<2x8xf32>, vector<8x128xf32>, vector<2x128xf32> -> vector<2x128xf32>
    %23 = arith.addf %20, %22 : vector<2x128xf32>
    %c0_12 = arith.constant 0 : index
    %c0_13 = arith.constant 0 : index
    %24 = vector.load %arg5[%c0_12, %c0_13] : memref<128x128xf32, #tpu.memory_space<vmem>>, vector<128x128xf32>
    %cst_14 = arith.constant dense<0.000000e+00> : vector<2x128xf32>
    %25 = tpu.matmul %23, %24, %cst_14 {dimension_numbers = #tpu.dot_dimension_numbers<[1], [0], [0], [1], [0, 0, 1, 1], [], []>} : vector<2x128xf32>, vector<128x128xf32>, vector<2x128xf32> -> vector<2x128xf32>
    %c0_15 = arith.constant 0 : index
    %c0_16 = arith.constant 0 : index
    %26 = vector.load %arg6[%c0_15, %c0_16] : memref<2x128xf32, #tpu.memory_space<vmem>>, vector<2x128xf32>
    tpu.vector_store %arg6[%c0_15, %c0_16], %25 {strides = array<i32>} : memref<2x128xf32, #tpu.memory_space<vmem>>, vector<2x128xf32>,
    return
  }
  func.func @transform_0(%arg0: i32) -> (i32, i32) {
    %c0_i32 = arith.constant 0 : i32
    %c0_i32_0 = arith.constant 0 : i32
    return %arg0, %c0_i32 : i32, i32
  }
  func.func @transform_1(%arg0: i32) -> (i32, i32) {
    %c0_i32 = arith.constant 0 : i32
    %c0_i32_0 = arith.constant 0 : i32
    return %arg0, %c0_i32 : i32, i32
  }
  func.func @transform_2(%arg0: i32) -> (i32, i32) {
    %c0_i32 = arith.constant 0 : i32
    %c0_i32_0 = arith.constant 0 : i32
    %c0_i32_1 = arith.constant 0 : i32
    return %c0_i32, %c0_i32_0 : i32, i32
  }
  func.func @transform_3(%arg0: i32) -> (i32, i32) {
    %c0_i32 = arith.constant 0 : i32
    %c0_i32_0 = arith.constant 0 : i32
    %c0_i32_1 = arith.constant 0 : i32
    return %c0_i32, %c0_i32_0 : i32, i32
  }
  func.func @transform_4(%arg0: i32) -> (i32, i32) {
    %c0_i32 = arith.constant 0 : i32
    %c0_i32_0 = arith.constant 0 : i32
    %c0_i32_1 = arith.constant 0 : i32
    return %c0_i32, %c0_i32_0 : i32, i32
  }
  func.func @transform_5(%arg0: i32) -> (i32, i32) {
    %c0_i32 = arith.constant 0 : i32
    %c0_i32_0 = arith.constant 0 : i32
    return %arg0, %c0_i32 : i32, i32
  }
}

module attributes {stable_mosaic.version = 11 : i64} {
  func.func @_sim_loss_kernel(%arg0: i32, %arg1: memref<2x128xf32, #tpu.memory_space<vmem>>, %arg2: memref<2x128xf32, #tpu.memory_space<vmem>>, %arg3: memref<1x1xf32, #tpu.memory_space<smem>>, %arg4: memref<2x2xf32, #tpu.memory_space<vmem>>, %arg5: memref<1x1xf32, #tpu.memory_space<smem>>) attributes {dimension_semantics = [#tpu.dimension_semantics<arbitrary>], iteration_bounds = array<i64: 1>, scalar_prefetch = 0 : i64, scratch_operands = 0 : i64, tpu.core_type = #tpu.core_type<tc>, window_params = [{pipeline_mode = #tpu.pipeline_mode<synchronous>, transform_indices = @transform_0, window_bounds = array<i64: 2, 128>}, {pipeline_mode = #tpu.pipeline_mode<synchronous>, transform_indices = @transform_1, window_bounds = array<i64: 2, 128>}, {transform_indices = @transform_2, window_bounds = array<i64: 1, 1>}, {pipeline_mode = #tpu.pipeline_mode<synchronous>, transform_indices = @transform_3, window_bounds = array<i64: 2, 2>}, {transform_indices = @transform_4, window_bounds = array<i64: 1, 1>}]} {
    %c0 = arith.constant 0 : index
    %c0_0 = arith.constant 0 : index
    %0 = vector.load %arg1[%c0, %c0_0] : memref<2x128xf32, #tpu.memory_space<vmem>>, vector<2x128xf32>
    %c0_1 = arith.constant 0 : index
    %c0_2 = arith.constant 0 : index
    %1 = vector.load %arg2[%c0_1, %c0_2] : memref<2x128xf32, #tpu.memory_space<vmem>>, vector<2x128xf32>
    %2 = arith.mulf %0, %0 : vector<2x128xf32>
    %cst = arith.constant dense<0.000000e+00> : vector<2xf32>
    %3 = vector.multi_reduction <add>, %2, %cst [1] : vector<2x128xf32> to vector<2xf32>
    %4 = vector.shape_cast %3 : vector<2xf32> to vector<2x1xf32>
    %cst_3 = arith.constant 9.99999996E-13 : f32
    %5 = vector.broadcast %cst_3 : f32 to vector<2x1xf32>
    %6 = arith.addf %4, %5 : vector<2x1xf32>
    %7 = math.rsqrt %6 : vector<2x1xf32>
    %8 = vector.broadcast %7 : vector<2x1xf32> to vector<2x128xf32>
    %9 = arith.mulf %0, %8 : vector<2x128xf32>
    %10 = arith.mulf %1, %1 : vector<2x128xf32>
    %cst_4 = arith.constant dense<0.000000e+00> : vector<2xf32>
    %11 = vector.multi_reduction <add>, %10, %cst_4 [1] : vector<2x128xf32> to vector<2xf32>
    %12 = vector.shape_cast %11 : vector<2xf32> to vector<2x1xf32>
    %cst_5 = arith.constant 9.99999996E-13 : f32
    %13 = vector.broadcast %cst_5 : f32 to vector<2x1xf32>
    %14 = arith.addf %12, %13 : vector<2x1xf32>
    %15 = math.rsqrt %14 : vector<2x1xf32>
    %16 = vector.broadcast %15 : vector<2x1xf32> to vector<2x128xf32>
    %17 = arith.mulf %1, %16 : vector<2x128xf32>
    %cst_6 = arith.constant dense<0.000000e+00> : vector<2x2xf32>
    %18 = tpu.matmul %9, %17, %cst_6 {dimension_numbers = #tpu.dot_dimension_numbers<[1], [1], [0], [0], [0, 0, 1, 0], [], []>} : vector<2x128xf32>, vector<2x128xf32>, vector<2x2xf32> -> vector<2x2xf32>
    %c0_7 = arith.constant 0 : index
    %c0_8 = arith.constant 0 : index
    %19 = vector.load %arg4[%c0_7, %c0_8] : memref<2x2xf32, #tpu.memory_space<vmem>>, vector<2x2xf32>
    tpu.vector_store %arg4[%c0_7, %c0_8], %18 {strides = array<i32>} : memref<2x2xf32, #tpu.memory_space<vmem>>, vector<2x2xf32>,
    %c0_9 = arith.constant 0 : index
    %c0_10 = arith.constant 0 : index
    %20 = memref.load %arg3[%c0_9, %c0_10] : memref<1x1xf32, #tpu.memory_space<smem>>
    %21 = vector.broadcast %20 : f32 to vector<2x2xf32>
    %22 = arith.mulf %18, %21 : vector<2x2xf32>
    %23 = vector.shape_cast %22 : vector<2x2xf32> to vector<1x2x2xf32>
    %cst_11 = arith.constant dense<0xFF800000> : vector<1xf32>
    %24 = vector.multi_reduction <maximumf>, %23, %cst_11 [1, 2] : vector<1x2x2xf32> to vector<1xf32>
    %25 = vector.shape_cast %24 : vector<1xf32> to vector<1x1x1xf32>
    %26 = vector.extract %25[0, 0, 0] : f32 from vector<1x1x1xf32>
    %27 = vector.broadcast %26 : f32 to vector<1x1xf32>
    %28 = vector.broadcast %27 : vector<1x1xf32> to vector<2x2xf32>
    %29 = arith.subf %22, %28 : vector<2x2xf32>
    %30 = math.exp %29 : vector<2x2xf32>
    %cst_12 = arith.constant dense<0.000000e+00> : vector<2xf32>
    %31 = vector.multi_reduction <add>, %30, %cst_12 [1] : vector<2x2xf32> to vector<2xf32>
    %32 = vector.shape_cast %31 : vector<2xf32> to vector<2x1xf32>
    %33 = math.log %32 : vector<2x1xf32>
    %34 = vector.broadcast %27 : vector<1x1xf32> to vector<2x1xf32>
    %35 = arith.addf %33, %34 : vector<2x1xf32>
    %cst_13 = arith.constant dense<0.000000e+00> : vector<2xf32>
    %36 = vector.multi_reduction <add>, %30, %cst_13 [0] : vector<2x2xf32> to vector<2xf32>
    %37 = vector.shape_cast %36 : vector<2xf32> to vector<1x2xf32>
    %38 = math.log %37 : vector<1x2xf32>
    %39 = vector.broadcast %27 : vector<1x1xf32> to vector<1x2xf32>
    %40 = arith.addf %38, %39 : vector<1x2xf32>
    %41 = arith.mulf %9, %17 : vector<2x128xf32>
    %42 = vector.shape_cast %41 : vector<2x128xf32> to vector<1x2x128xf32>
    %cst_14 = arith.constant dense<0.000000e+00> : vector<1xf32>
    %43 = vector.multi_reduction <add>, %42, %cst_14 [1, 2] : vector<1x2x128xf32> to vector<1xf32>
    %44 = vector.shape_cast %43 : vector<1xf32> to vector<1x1x1xf32>
    %45 = vector.extract %44[0, 0, 0] : f32 from vector<1x1x1xf32>
    %46 = arith.mulf %45, %20 : f32
    %47 = vector.shape_cast %35 : vector<2x1xf32> to vector<1x2x1xf32>
    %cst_15 = arith.constant dense<0.000000e+00> : vector<1xf32>
    %48 = vector.multi_reduction <add>, %47, %cst_15 [1, 2] : vector<1x2x1xf32> to vector<1xf32>
    %49 = vector.shape_cast %48 : vector<1xf32> to vector<1x1x1xf32>
    %50 = vector.extract %49[0, 0, 0] : f32 from vector<1x1x1xf32>
    %51 = vector.shape_cast %40 : vector<1x2xf32> to vector<1x1x2xf32>
    %cst_16 = arith.constant dense<0.000000e+00> : vector<1xf32>
    %52 = vector.multi_reduction <add>, %51, %cst_16 [1, 2] : vector<1x1x2xf32> to vector<1xf32>
    %53 = vector.shape_cast %52 : vector<1xf32> to vector<1x1x1xf32>
    %54 = vector.extract %53[0, 0, 0] : f32 from vector<1x1x1xf32>
    %55 = arith.addf %50, %54 : f32
    %cst_17 = arith.constant 2.000000e+00 : f32
    %56 = arith.mulf %cst_17, %46 : f32
    %57 = arith.subf %55, %56 : f32
    %cst_18 = arith.constant 2.000000e+00 : f32
    %58 = arith.divf %57, %cst_18 : f32
    %c0_19 = arith.constant 0 : index
    %c0_20 = arith.constant 0 : index
    %59 = memref.load %arg5[%c0_19, %c0_20] : memref<1x1xf32, #tpu.memory_space<smem>>
    memref.store %58, %arg5[%c0_19, %c0_20] : memref<1x1xf32, #tpu.memory_space<smem>>
    return
  }
  func.func @transform_0(%arg0: i32) -> (i32, i32) {
    %c0_i32 = arith.constant 0 : i32
    %c0_i32_0 = arith.constant 0 : i32
    %c0_i32_1 = arith.constant 0 : i32
    return %c0_i32, %c0_i32_0 : i32, i32
  }
  func.func @transform_1(%arg0: i32) -> (i32, i32) {
    %c0_i32 = arith.constant 0 : i32
    %c0_i32_0 = arith.constant 0 : i32
    %c0_i32_1 = arith.constant 0 : i32
    return %c0_i32, %c0_i32_0 : i32, i32
  }
  func.func @transform_2(%arg0: i32) -> (i32, i32) {
    %c0_i32 = arith.constant 0 : i32
    %c0_i32_0 = arith.constant 0 : i32
    %c0_i32_1 = arith.constant 0 : i32
    return %c0_i32, %c0_i32_0 : i32, i32
  }
  func.func @transform_3(%arg0: i32) -> (i32, i32) {
    %c0_i32 = arith.constant 0 : i32
    %c0_i32_0 = arith.constant 0 : i32
    %c0_i32_1 = arith.constant 0 : i32
    return %c0_i32, %c0_i32_0 : i32, i32
  }
  func.func @transform_4(%arg0: i32) -> (i32, i32) {
    %c0_i32 = arith.constant 0 : i32
    %c0_i32_0 = arith.constant 0 : i32
    %c0_i32_1 = arith.constant 0 : i32
    return %c0_i32, %c0_i32_0 : i32, i32
  }
}

</mosaic_0001>

<llo_original>
// kernel: tir_forward.3
$region0: #{tir_forward.3}
  #allocation0 [shape = 'u32[]', space=smem, size = 0x4, offset = 0x4, fixed_abs, tag = 'smem constant byte address 0x4 - core index']
  #allocation1 [shape = 'u32[144,128]{1,0:T(1,128)}', space=vmem, size = 0x12000, scoped, tag = 'internal scratch']
  %s0 = inlined_call_operand.vmem [shape: s32[2,8], index: 0, kind: input, shape index: {}]
  %s1 = inlined_call_operand.vmem [shape: s32[2,8], index: 1, kind: input, shape index: {}]
  %s2 = inlined_call_operand.vmem [shape: f32[64,128], index: 2, kind: input, shape index: {}]
  %s3 = inlined_call_operand.vmem [shape: f32[8,128], index: 3, kind: input, shape index: {}]
  %s4 = inlined_call_operand.vmem [shape: f32[128,128], index: 4, kind: input, shape index: {}]
  %s5 = inlined_call_operand.vmem [shape: f32[2,128], index: 5, kind: output, shape index: {}]
  %s6 = sld [smem:[#allocation0]]
  $region30: #{tir_forward.3} parent=0
    _
  %s8 = ssub.s32 1, %s6
  %s9 = scalar_select 0, %s8, %s6
  // Predicated region
  $region2: #{tir_forward.3} parent=0 // pred_check
    _
  $region3: #{tir_forward.3} parent=0 // pred_check_branch
    %11 = sbr.rel (0) target = $region5
  $region4: #{tir_forward.3} parent=0 // pred_region
    _
  $region5: #{tir_forward.3} parent=0 // pred_fallthru
    _
  // Predicated region
  $region6: #{tir_forward.3} parent=0 // pred_check
    _
  $region7: #{tir_forward.3} parent=0 // pred_check_branch
    %13 = sbr.rel (0) target = $region9
  $region8: #{tir_forward.3} parent=0 // pred_region
    _
  $region9: #{tir_forward.3} parent=0 // pred_fallthru
    _
  // Predicated region
  $region10: #{tir_forward.3} parent=0 // pred_check
    _
  $region11: #{tir_forward.3} parent=0 // pred_check_branch
    %15 = sbr.rel (0) target = $region13
  $region12: #{tir_forward.3} parent=0 // pred_region
    _
  $region13: #{tir_forward.3} parent=0 // pred_fallthru
    _
  // Predicated region
  $region14: #{tir_forward.3} parent=0 // pred_check
    _
  $region15: #{tir_forward.3} parent=0 // pred_check_branch
    %17 = sbr.rel (0) target = $region17
  $region16: #{tir_forward.3} parent=0 // pred_region
    _
  $region17: #{tir_forward.3} parent=0 // pred_fallthru
    _
  // Predicated region
  $region18: #{tir_forward.3} parent=0 // pred_check
    _
  $region19: #{tir_forward.3} parent=0 // pred_check_branch
    %19 = sbr.rel (0) target = $region21
  $region20: #{tir_forward.3} parent=0 // pred_region
    _
  $region21: #{tir_forward.3} parent=0 // pred_fallthru
    _
  %v20 = vld [vmem:[%s0] sm:$0x3]
  %v21 = vld [vmem:[%s1] sm:$0x3]
  %v22 = vcvt.s32.f32 %v21
  %vm23 = vcmask 58368
  %v24 = vsel %vm23, %v22, 0.0
  %25 = vadd.xlane.f32.xlu0 %v24
  %v26 = vpop.xlane.xlu0 %25
  %v27 = vmax.f32 %v26, 1.0
  %v28 = vrcp.pop %v27
  %v29 = vmul.f32 %v22, %v28
  %v30 = vlaneseq
  %v31 = vand.u32 %v30, 127
  %v32 = vlaneseq
  %v33 = vshrl.u32 %v32, 7
  %v34 = vsub.s32 0, %v33
  %v35 = vrot.slane %v20, %v34
  %37 = vbcast.lane.b32.xlu0 %v35, 256
  %v38 = vpop.permute.xlu0 %37
  %v39 = vlaneseq
  %v40 = vshrl.u32 %v39, 7
  %v41 = vsub.s32 1, %v40
  %v42 = vrot.slane %v20, %v41
  %44 = vbcast.lane.b32.xlu0 %v42, 256
  %v45 = vpop.permute.xlu0 %44
  %vm46 = vcmp.eq.s32.totalorder %v38, %v31
  %vm47 = vcmp.eq.s32.totalorder %v45, %v31
  %v48 = vlaneseq
  %v49 = vshrl.u32 %v48, 7
  %v50 = vsub.s32 0, %v49
  %v51 = vrot.slane %v29, %v50
  %53 = vbcast.lane.b32.xlu0 %v51, 256
  %v54 = vpop.permute.xlu0 %53
  %v55 = vlaneseq
  %v56 = vshrl.u32 %v55, 7
  %v57 = vsub.s32 1, %v56
  %v58 = vrot.slane %v29, %v57
  %60 = vbcast.lane.b32.xlu0 %v58, 256
  %v61 = vpop.permute.xlu0 %60
  %v62 = vsel %vm46, %v54, 0.0
  %v63 = vsel %vm47, %v61, 0.0
  %vm64 = vcmask 523264
  %v65 = vsel %vm64, %v62, 0.0
  %v66 = vrot.slane %v65, 4
  %v67 = vadd.f32 %v65, %v66
  %v68 = vrot.slane %v67, 2
  %v69 = vadd.f32 %v67, %v68
  %v70 = vrot.slane %v69, 1
  %v71 = vadd.f32 %v69, %v70
  %v72 = vsel %vm64, %v63, 0.0
  %v73 = vrot.slane %v72, 4
  %v74 = vadd.f32 %v72, %v73
  %v75 = vrot.slane %v74, 2
  %v76 = vadd.f32 %v74, %v75
  %v77 = vrot.slane %v76, 1
  %v78 = vadd.f32 %v76, %v77
  %v79 = vld [vmem:[%s2] sm:$0xff]
  %v80 = vld [vmem:[%s2 + $0x8] sm:$0xff]
  %v81 = vld [vmem:[%s2 + $0x10] sm:$0xff]
  %v82 = vld [vmem:[%s2 + $0x18] sm:$0xff]
  %v83 = vld [vmem:[%s2 + $0x20] sm:$0xff]
  %v84 = vld [vmem:[%s2 + $0x28] sm:$0xff]
  %v85 = vld [vmem:[%s2 + $0x30] sm:$0xff]
  %v86 = vld [vmem:[%s2 + $0x38] sm:$0xff]
  %v87 = vld [vmem:[%s3] sm:$0xff]
  %vm88 = vcmask 64512
  %v90 = vsel %vm88, %v29, 0
  %92 = vmatprep.subr.mxu0 0.0
  %93 = vmatpush1.msra.mxu0 %v87
  %94 = vmatprep.subr.mxu0 0.0
  %95 = vmatpush1.msra.mxu0 0.0
  %96 = vmatprep.subr.mxu0 0.0
  %97 = vmatpush1.msra.mxu0 0.0
  %98 = vmatprep.subr.mxu0 0.0
  %99 = vmatpush1.msra.mxu0 0.0
  %100 = vmatprep.subr.mxu0 0.0
  %101 = vmatpush1.msra.mxu0 0.0
  %102 = vmatprep.subr.mxu0 0.0
  %103 = vmatpush1.msra.mxu0 0.0
  %104 = vmatprep.subr.mxu0 0.0
  %105 = vmatpush1.msra.mxu0 0.0
  %106 = vmatprep.subr.mxu0 0.0
  %107 = vmatpush1.msra.mxu0 0.0
  %108 = vmatprep.subr.mxu0 0.0
  %109 = vmatpush1.msra.mxu0 0.0
  %110 = vmatprep.subr.mxu0 0.0
  %111 = vmatpush1.msra.mxu0 0.0
  %112 = vmatprep.subr.mxu0 0.0
  %113 = vmatpush1.msra.mxu0 0.0
  %114 = vmatprep.subr.mxu0 0.0
  %115 = vmatpush1.msra.mxu0 0.0
  %116 = vmatprep.subr.mxu0 0.0
  %117 = vmatpush1.msra.mxu0 0.0
  %118 = vmatprep.subr.mxu0 0.0
  %119 = vmatpush1.msra.mxu0 0.0
  %120 = vmatprep.subr.mxu0 0.0
  %121 = vmatpush1.msra.mxu0 0.0
  %122 = vmatprep.subr.mxu0 0.0
  %123 = vmatpush1.msra.mxu0 0.0
  %124 = vmatprep.subr.mxu0 0.0
  %125 = vmatpush1.msra.mxu0 0.0
  %126 = vmatprep.subr.mxu0 0.0
  %127 = vmatpush1.msra.mxu0 0.0
  %128 = vmatprep.subr.mxu0 0.0
  %129 = vmatpush1.msra.mxu0 0.0
  %130 = vmatprep.subr.mxu0 0.0
  %131 = vmatpush1.msra.mxu0 0.0
  %132 = vmatprep.subr.mxu0 0.0
  %133 = vmatpush1.msra.mxu0 0.0
  %134 = vmatprep.subr.mxu0 0.0
  %135 = vmatpush1.msra.mxu0 0.0
  %136 = vmatprep.subr.mxu0 0.0
  %137 = vmatpush1.msra.mxu0 0.0
  %138 = vmatprep.subr.mxu0 0.0
  %139 = vmatpush1.msra.mxu0 0.0
  %140 = vmatprep.subr.mxu0 0.0
  %141 = vmatpush1.msra.mxu0 0.0
  %142 = vmatprep.subr.mxu0 0.0
  %143 = vmatpush1.msra.mxu0 0.0
  %144 = vmatprep.subr.mxu0 0.0
  %145 = vmatpush1.msra.mxu0 0.0
  %146 = vmatprep.subr.mxu0 0.0
  %147 = vmatpush1.msra.mxu0 0.0
  %148 = vmatprep.subr.mxu0 0.0
  %149 = vmatpush1.msra.mxu0 0.0
  %150 = vmatprep.subr.mxu0 0.0
  %151 = vmatpush1.msra.mxu0 0.0
  %152 = vmatprep.subr.mxu0 0.0
  %153 = vmatpush1.msra.mxu0 0.0
  %154 = vmatprep.subr.mxu0 0.0
  %155 = vmatpush1.msra.mxu0 0.0
  %156 = vmatprep.mubr.f32.mxu0 0.0
  %157 = vmatmul.mubr.f32.gmra.mrb[0].mxu0 %v90
  %v158 = vpop.f32.mrb[0].mxu0
  %v159 = vadd.f32 0.0, %v158
  %v160 = vpop.f32.mrb[0].mxu0
  %161 = vdwg.mxu0
  %vm164 = vcmask 1041409
  %v165 = vsel %vm164, %v78, %v71
  %v166 = vsel %vm64, %v165, 0
  %168 = vmatprep.subr.mxu0 0.0
  %169 = vmatpush1.msra.mxu0 %v79
  %170 = vmatprep.subr.mxu0 0.0
  %171 = vmatpush1.msra.mxu0 %v80
  %172 = vmatprep.subr.mxu0 0.0
  %173 = vmatpush1.msra.mxu0 %v81
  %174 = vmatprep.subr.mxu0 0.0
  %175 = vmatpush1.msra.mxu0 %v82
  %176 = vmatprep.subr.mxu0 0.0
  %177 = vmatpush1.msra.mxu0 %v83
  %178 = vmatprep.subr.mxu0 0.0
  %179 = vmatpush1.msra.mxu0 %v84
  %180 = vmatprep.subr.mxu0 0.0
  %181 = vmatpush1.msra.mxu0 %v85
  %182 = vmatprep.subr.mxu0 0.0
  %183 = vmatpush1.msra.mxu0 %v86
  %184 = vmatprep.subr.mxu0 0.0
  %185 = vmatpush1.msra.mxu0 0.0
  %186 = vmatprep.subr.mxu0 0.0
  %187 = vmatpush1.msra.mxu0 0.0
  %188 = vmatprep.subr.mxu0 0.0
  %189 = vmatpush1.msra.mxu0 0.0
  %190 = vmatprep.subr.mxu0 0.0
  %191 = vmatpush1.msra.mxu0 0.0
  %192 = vmatprep.subr.mxu0 0.0
  %193 = vmatpush1.msra.mxu0 0.0
  %194 = vmatprep.subr.mxu0 0.0
  %195 = vmatpush1.msra.mxu0 0.0
  %196 = vmatprep.subr.mxu0 0.0
  %197 = vmatpush1.msra.mxu0 0.0
  %198 = vmatprep.subr.mxu0 0.0
  %199 = vmatpush1.msra.mxu0 0.0
  %200 = vmatprep.subr.mxu0 0.0
  %201 = vmatpush1.msra.mxu0 0.0
  %202 = vmatprep.subr.mxu0 0.0
  %203 = vmatpush1.msra.mxu0 0.0
  %204 = vmatprep.subr.mxu0 0.0
  %205 = vmatpush1.msra.mxu0 0.0
  %206 = vmatprep.subr.mxu0 0.0
  %207 = vmatpush1.msra.mxu0 0.0
  %208 = vmatprep.subr.mxu0 0.0
  %209 = vmatpush1.msra.mxu0 0.0
  %210 = vmatprep.subr.mxu0 0.0
  %211 = vmatpush1.msra.mxu0 0.0
  %212 = vmatprep.subr.mxu0 0.0
  %213 = vmatpush1.msra.mxu0 0.0
  %214 = vmatprep.subr.mxu0 0.0
  %215 = vmatpush1.msra.mxu0 0.0
  %216 = vmatprep.subr.mxu0 0.0
  %217 = vmatpush1.msra.mxu0 0.0
  %218 = vmatprep.subr.mxu0 0.0
  %219 = vmatpush1.msra.mxu0 0.0
  %220 = vmatprep.subr.mxu0 0.0
  %221 = vmatpush1.msra.mxu0 0.0
  %222 = vmatprep.subr.mxu0 0.0
  %223 = vmatpush1.msra.mxu0 0.0
  %224 = vmatprep.subr.mxu0 0.0
  %225 = vmatpush1.msra.mxu0 0.0
  %226 = vmatprep.subr.mxu0 0.0
  %227 = vmatpush1.msra.mxu0 0.0
  %228 = vmatprep.subr.mxu0 0.0
  %229 = vmatpush1.msra.mxu0 0.0
  %230 = vmatprep.subr.mxu0 0.0
  %231 = vmatpush1.msra.mxu0 0.0
  %232 = vmatprep.mubr.f32.mxu0 0.0
  %233 = vmatmul.mubr.f32.gmra.mrb[0].mxu0 %v166
  %v234 = vpop.f32.mrb[0].mxu0
  %v235 = vadd.f32 %v159, %v234
  %v236 = vpop.f32.mrb[0].mxu0
  %237 = vdwg.mxu0
  %v238 = vld [vmem:[%s4] sm:$0xff]
  %v239 = vld [vmem:[%s4 + $0x8] sm:$0xff]
  %v240 = vld [vmem:[%s4 + $0x10] sm:$0xff]
  %v241 = vld [vmem:[%s4 + $0x18] sm:$0xff]
  %v242 = vld [vmem:[%s4 + $0x20] sm:$0xff]
  %v243 = vld [vmem:[%s4 + $0x28] sm:$0xff]
  %v244 = vld [vmem:[%s4 + $0x30] sm:$0xff]
  %v245 = vld [vmem:[%s4 + $0x38] sm:$0xff]
  %v246 = vld [vmem:[%s4 + $0x40] sm:$0xff]
  %v247 = vld [vmem:[%s4 + $0x48] sm:$0xff]
  %v248 = vld [vmem:[%s4 + $0x50] sm:$0xff]
  %v249 = vld [vmem:[%s4 + $0x58] sm:$0xff]
  %v250 = vld [vmem:[%s4 + $0x60] sm:$0xff]
  %v251 = vld [vmem:[%s4 + $0x68] sm:$0xff]
  %v252 = vld [vmem:[%s4 + $0x70] sm:$0xff]
  %v253 = vld [vmem:[%s4 + $0x78] sm:$0xff]
  %254 = vmatprep.subr.mxu0 0.0
  %255 = vmatpush1.msra.mxu0 %v238
  %256 = vmatprep.subr.mxu0 0.0
  %257 = vmatpush1.msra.mxu0 %v239
  %258 = vmatprep.subr.mxu0 0.0
  %259 = vmatpush1.msra.mxu0 %v240
  %260 = vmatprep.subr.mxu0 0.0
  %261 = vmatpush1.msra.mxu0 %v241
  %262 = vmatprep.subr.mxu0 0.0
  %263 = vmatpush1.msra.mxu0 %v242
  %264 = vmatprep.subr.mxu0 0.0
  %265 = vmatpush1.msra.mxu0 %v243
  %266 = vmatprep.subr.mxu0 0.0
  %267 = vmatpush1.msra.mxu0 %v244
  %268 = vmatprep.subr.mxu0 0.0
  %269 = vmatpush1.msra.mxu0 %v245
  %270 = vmatprep.subr.mxu0 0.0
  %271 = vmatpush1.msra.mxu0 %v246
  %272 = vmatprep.subr.mxu0 0.0
  %273 = vmatpush1.msra.mxu0 %v247
  %274 = vmatprep.subr.mxu0 0.0
  %275 = vmatpush1.msra.mxu0 %v248
  %276 = vmatprep.subr.mxu0 0.0
  %277 = vmatpush1.msra.mxu0 %v249
  %278 = vmatprep.subr.mxu0 0.0
  %279 = vmatpush1.msra.mxu0 %v250
  %280 = vmatprep.subr.mxu0 0.0
  %281 = vmatpush1.msra.mxu0 %v251
  %282 = vmatprep.subr.mxu0 0.0
  %283 = vmatpush1.msra.mxu0 %v252
  %284 = vmatprep.subr.mxu0 0.0
  %285 = vmatpush1.msra.mxu0 %v253
  %286 = vmatprep.subr.mxu0 0.0
  %287 = vmatpush1.msra.mxu0 0.0
  %288 = vmatprep.subr.mxu0 0.0
  %289 = vmatpush1.msra.mxu0 0.0
  %290 = vmatprep.subr.mxu0 0.0
  %291 = vmatpush1.msra.mxu0 0.0
  %292 = vmatprep.subr.mxu0 0.0
  %293 = vmatpush1.msra.mxu0 0.0
  %294 = vmatprep.subr.mxu0 0.0
  %295 = vmatpush1.msra.mxu0 0.0
  %296 = vmatprep.subr.mxu0 0.0
  %297 = vmatpush1.msra.mxu0 0.0
  %298 = vmatprep.subr.mxu0 0.0
  %299 = vmatpush1.msra.mxu0 0.0
  %300 = vmatprep.subr.mxu0 0.0
  %301 = vmatpush1.msra.mxu0 0.0
  %302 = vmatprep.subr.mxu0 0.0
  %303 = vmatpush1.msra.mxu0 0.0
  %304 = vmatprep.subr.mxu0 0.0
  %305 = vmatpush1.msra.mxu0 0.0
  %306 = vmatprep.subr.mxu0 0.0
  %307 = vmatpush1.msra.mxu0 0.0
  %308 = vmatprep.subr.mxu0 0.0
  %309 = vmatpush1.msra.mxu0 0.0
  %310 = vmatprep.subr.mxu0 0.0
  %311 = vmatpush1.msra.mxu0 0.0
  %312 = vmatprep.subr.mxu0 0.0
  %313 = vmatpush1.msra.mxu0 0.0
  %314 = vmatprep.subr.mxu0 0.0
  %315 = vmatpush1.msra.mxu0 0.0
  %316 = vmatprep.subr.mxu0 0.0
  %317 = vmatpush1.msra.mxu0 0.0
  %318 = vmatprep.mubr.f32.mxu0 0.0
  %319 = vmatmul.mubr.f32.gmra.mrb[0].mxu0 %v235
  %v320 = vpop.f32.mrb[0].mxu0
  %v321 = vadd.f32 0.0, %v320
  %v322 = vpop.f32.mrb[0].mxu0
  %323 = vdwg.mxu0
  %324 = vst [vmem:[%s5] sm:$0x3] %v321
  // Predicated region
  $region22: #{tir_forward.3} parent=0 // pred_check
    _
  $region23: #{tir_forward.3} parent=0 // pred_check_branch
    %326 = sbr.rel (0) target = $region25
  $region24: #{tir_forward.3} parent=0 // pred_region
    _
  $region25: #{tir_forward.3} parent=0 // pred_fallthru
    _
  // Predicated region
  $region26: #{tir_forward.3} parent=0 // pred_check
    _
  $region27: #{tir_forward.3} parent=0 // pred_check_branch
    %328 = sbr.rel (0) target = $region29
  $region28: #{tir_forward.3} parent=0 // pred_region
    _
  $region29: #{tir_forward.3} parent=0 // pred_fallthru
    _

// kernel: tir_forward.5
$region0: #{tir_forward.5}
  #allocation0 [shape = 'u32[]', space=smem, size = 0x4, offset = 0x4, fixed_abs, tag = 'smem constant byte address 0x4 - core index']
  #allocation1 [shape = 'u32[144,128]{1,0:T(1,128)}', space=vmem, size = 0x12000, scoped, tag = 'internal scratch']
  #allocation2 [shape = 'f32[1,1]{1,0:T(1,128)S(6)}', space=smem, size = 0x200, scoped, tag = 'scoped memory for tir_forward.5']
  %s0 = inlined_call_operand.vmem [shape: f32[2,128], index: 0, kind: input, shape index: {}]
  %s1 = inlined_call_operand.vmem [shape: f32[2,128], index: 1, kind: input, shape index: {}]
  %s2 = inlined_call_operand.<no memory space> [shape: f32[1,1], index: 2, kind: input, shape index: {}]
  %s3 = inlined_call_operand.hbm [shape: f32[2,2], index: 3, kind: output, shape index: {0}]
  %s4 = inlined_call_operand.hbm [shape: f32[1,1], index: 4, kind: output, shape index: {1}]
  %5 = xla_tuple %s3, %s4
  %s6 = sld [smem:[#allocation0]]
  $region30: #{tir_forward.5} parent=0
    _
  %s8 = ssub.s32 1, %s6
  %s9 = scalar_select 0, %s8, %s6
  %10 = sst [smem:[#allocation2]] %s2
  $region1: #{tir_forward.5} parent=0
    #allocation3 [shape = 'u8[1024]{0}', space=vmem, size = 0x400, scoped, tag = 'output window, operand 0, single buffered']
    #allocation4 [shape = 's32[1]{0}', space=sflag, size = 0x4, scoped, tag = 'scoped memory for tir_forward.5']
    #allocation5 [shape = 's32[1]{0}', space=sflag, size = 0x4, scoped, tag = 'scoped memory for tir_forward.5']
    #allocation6 [shape = 'u8[512]{0}', space=smem, size = 0x200, scoped, tag = 'output window, operand 1, single buffered']
    %11 = vsyncpa [#allocation4], 0
    %12 = vsyncpa [#allocation5], 0
    // Predicated region
    $region2: #{tir_forward.5} parent=1 // pred_check
      _
    $region3: #{tir_forward.5} parent=1 // pred_check_branch
      %14 = sbr.rel (0) target = $region5
    $region4: #{tir_forward.5} parent=1 // pred_region
      _
    $region5: #{tir_forward.5} parent=1 // pred_fallthru
      _
    // Predicated region
    $region6: #{tir_forward.5} parent=1 // pred_check
      _
    $region7: #{tir_forward.5} parent=1 // pred_check_branch
      %16 = sbr.rel (0) target = $region9
    $region8: #{tir_forward.5} parent=1 // pred_region
      _
    $region9: #{tir_forward.5} parent=1 // pred_fallthru
      _
    // Predicated region
    $region10: #{tir_forward.5} parent=1 // pred_check
      _
    $region11: #{tir_forward.5} parent=1 // pred_check_branch
      %18 = sbr.rel (0) target = $region13
    $region12: #{tir_forward.5} parent=1 // pred_region
      _
    $region13: #{tir_forward.5} parent=1 // pred_fallthru
      _
    %v19 = vld [vmem:[%s0] sm:$0x3]
    %v20 = vld [vmem:[%s1] sm:$0x3]
    %v21 = vmul.f32 %v19, %v19
    %vm22 = vcmask 1041408
    %v23 = vsel %vm22, %v21, 0.0
    %24 = vadd.xlane.f32.xlu0 %v23
    %v25 = vpop.xlane.xlu0 %24
    %v26 = vadd.f32 %v25, 1e-12
    %v27 = vrsqrt.pop %v26
    %v28 = vmul.f32 %v19, %v27
    %v29 = vmul.f32 %v20, %v20
    %v30 = vsel %vm22, %v29, 0.0
    %31 = vadd.xlane.f32.xlu0 %v30
    %v32 = vpop.xlane.xlu0 %31
    %v33 = vadd.f32 %v32, 1e-12
    %v34 = vrsqrt.pop %v33
    %v35 = vmul.f32 %v20, %v34
    %36 = vmatprep.subr.mxu0 0.0
    %37 = vmatpush1.xpose.msra.mxu0 %v35
    %38 = vmatprep.subr.mxu0 0.0
    %39 = vmatpush1.xpose.msra.mxu0 0.0
    %40 = vmatprep.subr.mxu0 0.0
    %41 = vmatpush1.xpose.msra.mxu0 0.0
    %42 = vmatprep.subr.mxu0 0.0
    %43 = vmatpush1.xpose.msra.mxu0 0.0
    %44 = vmatprep.subr.mxu0 0.0
    %45 = vmatpush1.xpose.msra.mxu0 0.0
    %46 = vmatprep.subr.mxu0 0.0
    %47 = vmatpush1.xpose.msra.mxu0 0.0
    %48 = vmatprep.subr.mxu0 0.0
    %49 = vmatpush1.xpose.msra.mxu0 0.0
    %50 = vmatprep.subr.mxu0 0.0
    %51 = vmatpush1.xpose.msra.mxu0 0.0
    %52 = vmatprep.subr.mxu0 0.0
    %53 = vmatpush1.xpose.msra.mxu0 0.0
    %54 = vmatprep.subr.mxu0 0.0
    %55 = vmatpush1.xpose.msra.mxu0 0.0
    %56 = vmatprep.subr.mxu0 0.0
    %57 = vmatpush1.xpose.msra.mxu0 0.0
    %58 = vmatprep.subr.mxu0 0.0
    %59 = vmatpush1.xpose.msra.mxu0 0.0
    %60 = vmatprep.subr.mxu0 0.0
    %61 = vmatpush1.xpose.msra.mxu0 0.0
    %62 = vmatprep.subr.mxu0 0.0
    %63 = vmatpush1.xpose.msra.mxu0 0.0
    %64 = vmatprep.subr.mxu0 0.0
    %65 = vmatpush1.xpose.msra.mxu0 0.0
    %66 = vmatprep.subr.mxu0 0.0
    %67 = vmatpush1.xpose.msra.mxu0 0.0
    %68 = vmatprep.subr.mxu0 0.0
    %69 = vmatpush1.xpose.msra.mxu0 0.0
    %70 = vmatprep.subr.mxu0 0.0
    %71 = vmatpush1.xpose.msra.mxu0 0.0
    %72 = vmatprep.subr.mxu0 0.0
    %73 = vmatpush1.xpose.msra.mxu0 0.0
    %74 = vmatprep.subr.mxu0 0.0
    %75 = vmatpush1.xpose.msra.mxu0 0.0
    %76 = vmatprep.subr.mxu0 0.0
    %77 = vmatpush1.xpose.msra.mxu0 0.0
    %78 = vmatprep.subr.mxu0 0.0
    %79 = vmatpush1.xpose.msra.mxu0 0.0
    %80 = vmatprep.subr.mxu0 0.0
    %81 = vmatpush1.xpose.msra.mxu0 0.0
    %82 = vmatprep.subr.mxu0 0.0
    %83 = vmatpush1.xpose.msra.mxu0 0.0
    %84 = vmatprep.subr.mxu0 0.0
    %85 = vmatpush1.xpose.msra.mxu0 0.0
    %86 = vmatprep.subr.mxu0 0.0
    %87 = vmatpush1.xpose.msra.mxu0 0.0
    %88 = vmatprep.subr.mxu0 0.0
    %89 = vmatpush1.xpose.msra.mxu0 0.0
    %90 = vmatprep.subr.mxu0 0.0
    %91 = vmatpush1.xpose.msra.mxu0 0.0
    %92 = vmatprep.subr.mxu0 0.0
    %93 = vmatpush1.xpose.msra.mxu0 0.0
    %94 = vmatprep.subr.mxu0 0.0
    %95 = vmatpush1.xpose.msra.mxu0 0.0
    %96 = vmatprep.subr.mxu0 0.0
    %97 = vmatpush1.xpose.msra.mxu0 0.0
    %98 = vmatprep.subr.mxu0 0.0
    %99 = vmatpush1.xpose.msra.mxu0 0.0
    %100 = vmatprep.mubr.f32.mxu0 0.0
    %101 = vmatmul.mubr.f32.gmra.mrb[0].mxu0 %v28
    %v102 = vpop.f32.mrb[0].mxu0
    %v103 = vadd.f32 0.0, %v102
    %v104 = vpop.f32.mrb[0].mxu0
    %105 = vdwg.mxu0
    %vm106 = vcmask 9216
    %107 = vst.msk [vmem:[#allocation3] sm:$0x3] %vm106, %v103
    %s108 = sld [smem:[#allocation2]]
    %v109 = vstv %s108
    %v110 = vmul.f32 %v103, %v109
    %v111 = vsel %vm106, %v110, -inf
    %112 = vmax.xlane.f32.xlu0 %v111
    %v113 = vpop.xlane.xlu0 %112
    %v114 = vrot.slane %v113, 4
    %v115 = vmax.f32 %v113, %v114
    %v116 = vrot.slane %v115, 2
    %v117 = vmax.f32 %v115, %v116
    %v118 = vrot.slane %v117, 1
    %v119 = vmax.f32 %v117, %v118
    %s120 = vtos %v119
    %v121 = vstv %s120
    %v122 = vsub.f32 %v110, %v121
    %v123 = vmul.f32 %v122, 1.442695
    %v124 = vpow.pop %v123
    %v125 = vsel %vm106, %v124, 0.0
    %126 = vadd.xlane.f32.xlu0 %v125
    %v127 = vpop.xlane.xlu0 %126
    %v128 = vlog2.pop %v127
    %v129 = vmul.f32 %v128, 0.6931472
    %v130 = vadd.f32 %v129, %v121
    %v131 = vrot.slane %v125, 4
    %v132 = vadd.f32 %v125, %v131
    %v133 = vrot.slane %v132, 2
    %v134 = vadd.f32 %v132, %v133
    %v135 = vrot.slane %v134, 1
    %v136 = vadd.f32 %v134, %v135
    %v137 = vlog2.pop %v136
    %v138 = vmul.f32 %v137, 0.6931472
    %v139 = vadd.f32 %v138, %v121
    %v140 = vmul.f32 %v28, %v35
    %v141 = vsel %vm22, %v140, 0.0
    %142 = vadd.xlane.f32.xlu0 %v141
    %v143 = vpop.xlane.xlu0 %142
    %v144 = vrot.slane %v143, 4
    %v145 = vadd.f32 %v143, %v144
    %v146 = vrot.slane %v145, 2
    %v147 = vadd.f32 %v145, %v146
    %v148 = vrot.slane %v147, 1
    %v149 = vadd.f32 %v147, %v148
    %s150 = vtos %v149
    %s151 = smul.f32 %s150, %s108
    %vm152 = vcmask 1024
    %v153 = vsel %vm152, %v130, 0.0
    %154 = vadd.xlane.f32.xlu0 %v153
    %v155 = vpop.xlane.xlu0 %154
    %v156 = vrot.slane %v155, 4
    %v157 = vadd.f32 %v155, %v156
    %v158 = vrot.slane %v157, 2
    %v159 = vadd.f32 %v157, %v158
    %v160 = vrot.slane %v159, 1
    %v161 = vadd.f32 %v159, %v160
    %s162 = vtos %v161
    %vm163 = vcmask 8192
    %v164 = vsel %vm163, %v139, 0.0
    %165 = vadd.xlane.f32.xlu0 %v164
    %v166 = vpop.xlane.xlu0 %165
    %v167 = vrot.slane %v166, 4
    %v168 = vadd.f32 %v166, %v167
    %v169 = vrot.slane %v168, 2
    %v170 = vadd.f32 %v168, %v169
    %v171 = vrot.slane %v170, 1
    %v172 = vadd.f32 %v170, %v171
    %s173 = vtos %v172
    %s174 = sadd.f32 %s162, %s173
    %s175 = smul.f32 %s151, 2.0
    %s176 = ssub.f32 %s174, %s175
    %v177 = vrcp.pop 2.0
    %s178 = vtos %v177
    %s179 = smul.f32 %s176, %s178
    %s180 = scalar_lea.smem [#allocation6], 0
    %181 = sst [smem:[%s180]] %s179
    // Predicated region
    $region14: #{tir_forward.5} parent=1 // pred_check
      _
    $region15: #{tir_forward.5} parent=1 // pred_check_branch
      %183 = sbr.rel (0) target = $region17
    $region16: #{tir_forward.5} parent=1 // pred_region
      %s185 = ssub.s32 32, 32
      %186 = vsyncadd [#allocation4], %s185
      %s188 = sshll.u32 [#allocation3], 4
      %s189 = int_to_ptr.vmem [resolvable:$true] %s188
      %191 = dma.vmem_to_hbm [thread:$0]  %s189, 32, %s3, [#allocation4]
    $region17: #{tir_forward.5} parent=1 // pred_fallthru
      _
    // Predicated region
    $region18: #{tir_forward.5} parent=1 // pred_check
      _
    $region19: #{tir_forward.5} parent=1 // pred_check_branch
      %193 = sbr.rel (0) target = $region21
    $region20: #{tir_forward.5} parent=1 // pred_region
      %s195 = ssub.s32 16, 16
      %196 = vsyncadd [#allocation5], %s195
      %199 = dma.smem_to_hbm [#allocation6], 16, %s4, [#allocation5]
    $region21: #{tir_forward.5} parent=1 // pred_fallthru
      _
    // Predicated region
    $region22: #{tir_forward.5} parent=1 // pred_check
      _
    $region23: #{tir_forward.5} parent=1 // pred_check_branch
      %201 = sbr.rel (0) target = $region25
    $region24: #{tir_forward.5} parent=1 // pred_region
      %202 = dma.done [#allocation4], 32
    $region25: #{tir_forward.5} parent=1 // pred_fallthru
      _
    // Predicated region
    $region26: #{tir_forward.5} parent=1 // pred_check
      _
    $region27: #{tir_forward.5} parent=1 // pred_check_branch
      %204 = sbr.rel (0) target = $region29
    $region28: #{tir_forward.5} parent=1 // pred_region
      %205 = dma.done [#allocation5], 16
    $region29: #{tir_forward.5} parent=1 // pred_fallthru
      _
    %206 = sfence
    %207 = vsyncpa [#allocation4], 1
    %208 = vsyncpa [#allocation5], 1

// kernel: tir_forward.4
$region0: #{tir_forward.4}
  #allocation0 [shape = 'u32[]', space=smem, size = 0x4, offset = 0x4, fixed_abs, tag = 'smem constant byte address 0x4 - core index']
  #allocation1 [shape = 'u32[144,128]{1,0:T(1,128)}', space=vmem, size = 0x12000, scoped, tag = 'internal scratch']
  %s0 = inlined_call_operand.vmem [shape: f32[8,768], index: 0, kind: input, shape index: {}]
  %s1 = inlined_call_operand.vmem [shape: bf16[768,128], index: 1, kind: input, shape index: {}]
  %s2 = inlined_call_operand.vmem [shape: f32[128,128], index: 2, kind: input, shape index: {}]
  %s3 = inlined_call_operand.vmem [shape: f32[8,1], index: 3, kind: input, shape index: {}]
  %s4 = inlined_call_operand.vmem [shape: f32[2,128], index: 4, kind: output, shape index: {}]
  %s5 = sld [smem:[#allocation0]]
  $region26: #{tir_forward.4} parent=0
    _
  %s7 = ssub.s32 1, %s5
  %s8 = scalar_select 0, %s7, %s5
  // Predicated region
  $region2: #{tir_forward.4} parent=0 // pred_check
    _
  $region3: #{tir_forward.4} parent=0 // pred_check_branch
    %10 = sbr.rel (0) target = $region5
  $region4: #{tir_forward.4} parent=0 // pred_region
    _
  $region5: #{tir_forward.4} parent=0 // pred_fallthru
    _
  // Predicated region
  $region6: #{tir_forward.4} parent=0 // pred_check
    _
  $region7: #{tir_forward.4} parent=0 // pred_check_branch
    %12 = sbr.rel (0) target = $region9
  $region8: #{tir_forward.4} parent=0 // pred_region
    _
  $region9: #{tir_forward.4} parent=0 // pred_fallthru
    _
  // Predicated region
  $region10: #{tir_forward.4} parent=0 // pred_check
    _
  $region11: #{tir_forward.4} parent=0 // pred_check_branch
    %14 = sbr.rel (0) target = $region13
  $region12: #{tir_forward.4} parent=0 // pred_region
    _
  $region13: #{tir_forward.4} parent=0 // pred_fallthru
    _
  // Predicated region
  $region14: #{tir_forward.4} parent=0 // pred_check
    _
  $region15: #{tir_forward.4} parent=0 // pred_check_branch
    %16 = sbr.rel (0) target = $region17
  $region16: #{tir_forward.4} parent=0 // pred_region
    _
  $region17: #{tir_forward.4} parent=0 // pred_fallthru
    _
  %v18 = vld [vmem:[%s0] sm:$0xff]
  %v19 = vld [vmem:[%s0 + $0x8] sm:$0xff]
  %v20 = vld [vmem:[%s0 + $0x10] sm:$0xff]
  %v21 = vld [vmem:[%s0 + $0x18] sm:$0xff]
  %v22 = vld [vmem:[%s0 + $0x20] sm:$0xff]
  %v23 = vld [vmem:[%s0 + $0x28] sm:$0xff]
  %v24 = vpack.c.bf16 %v18, %v18
  %v25 = vpack.c.bf16 %v19, %v19
  %v26 = vpack.c.bf16 %v20, %v20
  %v27 = vpack.c.bf16 %v21, %v21
  %v28 = vpack.c.bf16 %v22, %v22
  %v29 = vpack.c.bf16 %v23, %v23
  %v30 = vld [vmem:[%s1] sm:$0xf]
  %v31 = vld [vmem:[%s1 + $0x4] sm:$0xf]
  %v32 = vld [vmem:[%s1 + $0x8] sm:$0xf]
  %v33 = vld [vmem:[%s1 + $0xc] sm:$0xf]
  %v34 = vld [vmem:[%s1 + $0x10] sm:$0xf]
  %v35 = vld [vmem:[%s1 + $0x14] sm:$0xf]
  %v36 = vld [vmem:[%s1 + $0x18] sm:$0xf]
  %v37 = vld [vmem:[%s1 + $0x1c] sm:$0xf]
  %v38 = vld [vmem:[%s1 + $0x20] sm:$0xf]
  %v39 = vld [vmem:[%s1 + $0x24] sm:$0xf]
  %v40 = vld [vmem:[%s1 + $0x28] sm:$0xf]
  %v41 = vld [vmem:[%s1 + $0x2c] sm:$0xf]
  %v42 = vld [vmem:[%s1 + $0x30] sm:$0xf]
  %v43 = vld [vmem:[%s1 + $0x34] sm:$0xf]
  %v44 = vld [vmem:[%s1 + $0x38] sm:$0xf]
  %v45 = vld [vmem:[%s1 + $0x3c] sm:$0xf]
  %v46 = vld [vmem:[%s1 + $0x40] sm:$0xf]
  %v47 = vld [vmem:[%s1 + $0x44] sm:$0xf]
  %v48 = vld [vmem:[%s1 + $0x48] sm:$0xf]
  %v49 = vld [vmem:[%s1 + $0x4c] sm:$0xf]
  %v50 = vld [vmem:[%s1 + $0x50] sm:$0xf]
  %v51 = vld [vmem:[%s1 + $0x54] sm:$0xf]
  %v52 = vld [vmem:[%s1 + $0x58] sm:$0xf]
  %v53 = vld [vmem:[%s1 + $0x5c] sm:$0xf]
  %v54 = vld [vmem:[%s1 + $0x60] sm:$0xf]
  %v55 = vld [vmem:[%s1 + $0x64] sm:$0xf]
  %v56 = vld [vmem:[%s1 + $0x68] sm:$0xf]
  %v57 = vld [vmem:[%s1 + $0x6c] sm:$0xf]
  %v58 = vld [vmem:[%s1 + $0x70] sm:$0xf]
  %v59 = vld [vmem:[%s1 + $0x74] sm:$0xf]
  %v60 = vld [vmem:[%s1 + $0x78] sm:$0xf]
  %v61 = vld [vmem:[%s1 + $0x7c] sm:$0xf]
  %v62 = vld [vmem:[%s1 + $0x80] sm:$0xf]
  %v63 = vld [vmem:[%s1 + $0x84] sm:$0xf]
  %v64 = vld [vmem:[%s1 + $0x88] sm:$0xf]
  %v65 = vld [vmem:[%s1 + $0x8c] sm:$0xf]
  %v66 = vld [vmem:[%s1 + $0x90] sm:$0xf]
  %v67 = vld [vmem:[%s1 + $0x94] sm:$0xf]
  %v68 = vld [vmem:[%s1 + $0x98] sm:$0xf]
  %v69 = vld [vmem:[%s1 + $0x9c] sm:$0xf]
  %v70 = vld [vmem:[%s1 + $0xa0] sm:$0xf]
  %v71 = vld [vmem:[%s1 + $0xa4] sm:$0xf]
  %v72 = vld [vmem:[%s1 + $0xa8] sm:$0xf]
  %v73 = vld [vmem:[%s1 + $0xac] sm:$0xf]
  %v74 = vld [vmem:[%s1 + $0xb0] sm:$0xf]
  %v75 = vld [vmem:[%s1 + $0xb4] sm:$0xf]
  %v76 = vld [vmem:[%s1 + $0xb8] sm:$0xf]
  %v77 = vld [vmem:[%s1 + $0xbc] sm:$0xf]
  %v78 = vld [vmem:[%s1 + $0xc0] sm:$0xf]
  %v79 = vld [vmem:[%s1 + $0xc4] sm:$0xf]
  %v80 = vld [vmem:[%s1 + $0xc8] sm:$0xf]
  %v81 = vld [vmem:[%s1 + $0xcc] sm:$0xf]
  %v82 = vld [vmem:[%s1 + $0xd0] sm:$0xf]
  %v83 = vld [vmem:[%s1 + $0xd4] sm:$0xf]
  %v84 = vld [vmem:[%s1 + $0xd8] sm:$0xf]
  %v85 = vld [vmem:[%s1 + $0xdc] sm:$0xf]
  %v86 = vld [vmem:[%s1 + $0xe0] sm:$0xf]
  %v87 = vld [vmem:[%s1 + $0xe4] sm:$0xf]
  %v88 = vld [vmem:[%s1 + $0xe8] sm:$0xf]
  %v89 = vld [vmem:[%s1 + $0xec] sm:$0xf]
  %v90 = vld [vmem:[%s1 + $0xf0] sm:$0xf]
  %v91 = vld [vmem:[%s1 + $0xf4] sm:$0xf]
  %v92 = vld [vmem:[%s1 + $0xf8] sm:$0xf]
  %v93 = vld [vmem:[%s1 + $0xfc] sm:$0xf]
  %v94 = vld [vmem:[%s1 + $0x100] sm:$0xf]
  %v95 = vld [vmem:[%s1 + $0x104] sm:$0xf]
  %v96 = vld [vmem:[%s1 + $0x108] sm:$0xf]
  %v97 = vld [vmem:[%s1 + $0x10c] sm:$0xf]
  %v98 = vld [vmem:[%s1 + $0x110] sm:$0xf]
  %v99 = vld [vmem:[%s1 + $0x114] sm:$0xf]
  %v100 = vld [vmem:[%s1 + $0x118] sm:$0xf]
  %v101 = vld [vmem:[%s1 + $0x11c] sm:$0xf]
  %v102 = vld [vmem:[%s1 + $0x120] sm:$0xf]
  %v103 = vld [vmem:[%s1 + $0x124] sm:$0xf]
  %v104 = vld [vmem:[%s1 + $0x128] sm:$0xf]
  %v105 = vld [vmem:[%s1 + $0x12c] sm:$0xf]
  %v106 = vld [vmem:[%s1 + $0x130] sm:$0xf]
  %v107 = vld [vmem:[%s1 + $0x134] sm:$0xf]
  %v108 = vld [vmem:[%s1 + $0x138] sm:$0xf]
  %v109 = vld [vmem:[%s1 + $0x13c] sm:$0xf]
  %v110 = vld [vmem:[%s1 + $0x140] sm:$0xf]
  %v111 = vld [vmem:[%s1 + $0x144] sm:$0xf]
  %v112 = vld [vmem:[%s1 + $0x148] sm:$0xf]
  %v113 = vld [vmem:[%s1 + $0x14c] sm:$0xf]
  %v114 = vld [vmem:[%s1 + $0x150] sm:$0xf]
  %v115 = vld [vmem:[%s1 + $0x154] sm:$0xf]
  %v116 = vld [vmem:[%s1 + $0x158] sm:$0xf]
  %v117 = vld [vmem:[%s1 + $0x15c] sm:$0xf]
  %v118 = vld [vmem:[%s1 + $0x160] sm:$0xf]
  %v119 = vld [vmem:[%s1 + $0x164] sm:$0xf]
  %v120 = vld [vmem:[%s1 + $0x168] sm:$0xf]
  %v121 = vld [vmem:[%s1 + $0x16c] sm:$0xf]
  %v122 = vld [vmem:[%s1 + $0x170] sm:$0xf]
  %v123 = vld [vmem:[%s1 + $0x174] sm:$0xf]
  %v124 = vld [vmem:[%s1 + $0x178] sm:$0xf]
  %v125 = vld [vmem:[%s1 + $0x17c] sm:$0xf]
  %v222 = vunpack.c.l.b16 %v30
  %v223 = vunpack.c.l.b16 %v31
  %v224 = vunpack.c.l.b16 %v32
  %v225 = vunpack.c.l.b16 %v33
  %v226 = vunpack.c.l.b16 %v34
  %v227 = vunpack.c.l.b16 %v35
  %v228 = vunpack.c.l.b16 %v36
  %v229 = vunpack.c.l.b16 %v37
  %v230 = vunpack.c.l.b16 %v38
  %v231 = vunpack.c.l.b16 %v39
  %v232 = vunpack.c.l.b16 %v40
  %v233 = vunpack.c.l.b16 %v41
  %v234 = vunpack.c.l.b16 %v42
  %v235 = vunpack.c.l.b16 %v43
  %v236 = vunpack.c.l.b16 %v44
  %v237 = vunpack.c.l.b16 %v45
  %v238 = vunpack.c.l.b16 %v46
  %v239 = vunpack.c.l.b16 %v47
  %v240 = vunpack.c.l.b16 %v48
  %v241 = vunpack.c.l.b16 %v49
  %v242 = vunpack.c.l.b16 %v50
  %v243 = vunpack.c.l.b16 %v51
  %v244 = vunpack.c.l.b16 %v52
  %v245 = vunpack.c.l.b16 %v53
  %v246 = vunpack.c.l.b16 %v54
  %v247 = vunpack.c.l.b16 %v55
  %v248 = vunpack.c.l.b16 %v56
  %v249 = vunpack.c.l.b16 %v57
  %v250 = vunpack.c.l.b16 %v58
  %v251 = vunpack.c.l.b16 %v59
  %v252 = vunpack.c.l.b16 %v60
  %v253 = vunpack.c.l.b16 %v61
  %v254 = vunpack.c.l.b16 %v62
  %v255 = vunpack.c.l.b16 %v63
  %v256 = vunpack.c.l.b16 %v64
  %v257 = vunpack.c.l.b16 %v65
  %v258 = vunpack.c.l.b16 %v66
  %v259 = vunpack.c.l.b16 %v67
  %v260 = vunpack.c.l.b16 %v68
  %v261 = vunpack.c.l.b16 %v69
  %v262 = vunpack.c.l.b16 %v70
  %v263 = vunpack.c.l.b16 %v71
  %v264 = vunpack.c.l.b16 %v72
  %v265 = vunpack.c.l.b16 %v73
  %v266 = vunpack.c.l.b16 %v74
  %v267 = vunpack.c.l.b16 %v75
  %v268 = vunpack.c.l.b16 %v76
  %v269 = vunpack.c.l.b16 %v77
  %v270 = vunpack.c.l.b16 %v78
  %v271 = vunpack.c.l.b16 %v79
  %v272 = vunpack.c.l.b16 %v80
  %v273 = vunpack.c.l.b16 %v81
  %v274 = vunpack.c.l.b16 %v82
  %v275 = vunpack.c.l.b16 %v83
  %v276 = vunpack.c.l.b16 %v84
  %v277 = vunpack.c.l.b16 %v85
  %v278 = vunpack.c.l.b16 %v86
  %v279 = vunpack.c.l.b16 %v87
  %v280 = vunpack.c.l.b16 %v88
  %v281 = vunpack.c.l.b16 %v89
  %v282 = vunpack.c.l.b16 %v90
  %v283 = vunpack.c.l.b16 %v91
  %v284 = vunpack.c.l.b16 %v92
  %v285 = vunpack.c.l.b16 %v93
  %v286 = vunpack.c.l.b16 %v94
  %v287 = vunpack.c.l.b16 %v95
  %v288 = vunpack.c.l.b16 %v96
  %v289 = vunpack.c.l.b16 %v97
  %v290 = vunpack.c.l.b16 %v98
  %v291 = vunpack.c.l.b16 %v99
  %v292 = vunpack.c.l.b16 %v100
  %v293 = vunpack.c.l.b16 %v101
  %v294 = vunpack.c.l.b16 %v102
  %v295 = vunpack.c.l.b16 %v103
  %v296 = vunpack.c.l.b16 %v104
  %v297 = vunpack.c.l.b16 %v105
  %v298 = vunpack.c.l.b16 %v106
  %v299 = vunpack.c.l.b16 %v107
  %v300 = vunpack.c.l.b16 %v108
  %v301 = vunpack.c.l.b16 %v109
  %v302 = vunpack.c.l.b16 %v110
  %v303 = vunpack.c.l.b16 %v111
  %v304 = vunpack.c.l.b16 %v112
  %v305 = vunpack.c.l.b16 %v113
  %v306 = vunpack.c.l.b16 %v114
  %v307 = vunpack.c.l.b16 %v115
  %v308 = vunpack.c.l.b16 %v116
  %v309 = vunpack.c.l.b16 %v117
  %v310 = vunpack.c.l.b16 %v118
  %v311 = vunpack.c.l.b16 %v119
  %v312 = vunpack.c.l.b16 %v120
  %v313 = vunpack.c.l.b16 %v121
  %v314 = vunpack.c.l.b16 %v122
  %v315 = vunpack.c.l.b16 %v123
  %v316 = vunpack.c.l.b16 %v124
  %v317 = vunpack.c.l.b16 %v125
  %v318 = vpack.c.b16 %v223, %v222
  %v319 = vpack.c.b16 %v225, %v224
  %v320 = vpack.c.b16 %v227, %v226
  %v321 = vpack.c.b16 %v229, %v228
  %v322 = vpack.c.b16 %v231, %v230
  %v323 = vpack.c.b16 %v233, %v232
  %v324 = vpack.c.b16 %v235, %v234
  %v325 = vpack.c.b16 %v237, %v236
  %v326 = vpack.c.b16 %v239, %v238
  %v327 = vpack.c.b16 %v241, %v240
  %v328 = vpack.c.b16 %v243, %v242
  %v329 = vpack.c.b16 %v245, %v244
  %v330 = vpack.c.b16 %v247, %v246
  %v331 = vpack.c.b16 %v249, %v248
  %v332 = vpack.c.b16 %v251, %v250
  %v333 = vpack.c.b16 %v253, %v252
  %v334 = vpack.c.b16 %v255, %v254
  %v335 = vpack.c.b16 %v257, %v256
  %v336 = vpack.c.b16 %v259, %v258
  %v337 = vpack.c.b16 %v261, %v260
  %v338 = vpack.c.b16 %v263, %v262
  %v339 = vpack.c.b16 %v265, %v264
  %v340 = vpack.c.b16 %v267, %v266
  %v341 = vpack.c.b16 %v269, %v268
  %v342 = vpack.c.b16 %v271, %v270
  %v343 = vpack.c.b16 %v273, %v272
  %v344 = vpack.c.b16 %v275, %v274
  %v345 = vpack.c.b16 %v277, %v276
  %v346 = vpack.c.b16 %v279, %v278
  %v347 = vpack.c.b16 %v281, %v280
  %v348 = vpack.c.b16 %v283, %v282
  %v349 = vpack.c.b16 %v285, %v284
  %v350 = vpack.c.b16 %v287, %v286
  %v351 = vpack.c.b16 %v289, %v288
  %v352 = vpack.c.b16 %v291, %v290
  %v353 = vpack.c.b16 %v293, %v292
  %v354 = vpack.c.b16 %v295, %v294
  %v355 = vpack.c.b16 %v297, %v296
  %v356 = vpack.c.b16 %v299, %v298
  %v357 = vpack.c.b16 %v301, %v300
  %v358 = vpack.c.b16 %v303, %v302
  %v359 = vpack.c.b16 %v305, %v304
  %v360 = vpack.c.b16 %v307, %v306
  %v361 = vpack.c.b16 %v309, %v308
  %v362 = vpack.c.b16 %v311, %v310
  %v363 = vpack.c.b16 %v313, %v312
  %v364 = vpack.c.b16 %v315, %v314
  %v365 = vpack.c.b16 %v317, %v316
  %414 = vmatprep.subr.bf16.mxu0 0
  %415 = vmatpush1.bf16.msra.mxu0 %v318
  %416 = vmatprep.subr.bf16.mxu0 0
  %417 = vmatpush1.bf16.msra.mxu0 %v319
  %418 = vmatprep.subr.bf16.mxu0 0
  %419 = vmatpush1.bf16.msra.mxu0 %v320
  %420 = vmatprep.subr.bf16.mxu0 0
  %421 = vmatpush1.bf16.msra.mxu0 %v321
  %422 = vmatprep.subr.bf16.mxu0 0
  %423 = vmatpush1.bf16.msra.mxu0 %v322
  %424 = vmatprep.subr.bf16.mxu0 0
  %425 = vmatpush1.bf16.msra.mxu0 %v323
  %426 = vmatprep.subr.bf16.mxu0 0
  %427 = vmatpush1.bf16.msra.mxu0 %v324
  %428 = vmatprep.subr.bf16.mxu0 0
  %429 = vmatpush1.bf16.msra.mxu0 %v325
  %430 = vmatprep.subr.bf16.mxu0 0
  %431 = vmatpush1.bf16.msra.mxu0 %v326
  %432 = vmatprep.subr.bf16.mxu0 0
  %433 = vmatpush1.bf16.msra.mxu0 %v327
  %434 = vmatprep.subr.bf16.mxu0 0
  %435 = vmatpush1.bf16.msra.mxu0 %v328
  %436 = vmatprep.subr.bf16.mxu0 0
  %437 = vmatpush1.bf16.msra.mxu0 %v329
  %438 = vmatprep.subr.bf16.mxu0 0
  %439 = vmatpush1.bf16.msra.mxu0 %v330
  %440 = vmatprep.subr.bf16.mxu0 0
  %441 = vmatpush1.bf16.msra.mxu0 %v331
  %442 = vmatprep.subr.bf16.mxu0 0
  %443 = vmatpush1.bf16.msra.mxu0 %v332
  %444 = vmatprep.subr.bf16.mxu0 0
  %445 = vmatpush1.bf16.msra.mxu0 %v333
  %446 = vmatprep.mubr.bf16.mxu0 %v25
  %447 = vmatmul.mubr.bf16.gmra.mrb[0].mxu0 %v24
  %v448 = vpop.f32.mrb[0].mxu0
  %v449 = vadd.f32 0.0, %v448
  %v450 = vpop.f32.mrb[0].mxu0
  %v451 = vpop.f32.mrb[0].mxu0
  %v452 = vpop.f32.mrb[0].mxu0
  %453 = vdwg.mxu0
  %454 = vmatprep.subr.bf16.mxu0 0
  %455 = vmatpush1.bf16.msra.mxu0 %v334
  %456 = vmatprep.subr.bf16.mxu0 0
  %457 = vmatpush1.bf16.msra.mxu0 %v335
  %458 = vmatprep.subr.bf16.mxu0 0
  %459 = vmatpush1.bf16.msra.mxu0 %v336
  %460 = vmatprep.subr.bf16.mxu0 0
  %461 = vmatpush1.bf16.msra.mxu0 %v337
  %462 = vmatprep.subr.bf16.mxu0 0
  %463 = vmatpush1.bf16.msra.mxu0 %v338
  %464 = vmatprep.subr.bf16.mxu0 0
  %465 = vmatpush1.bf16.msra.mxu0 %v339
  %466 = vmatprep.subr.bf16.mxu0 0
  %467 = vmatpush1.bf16.msra.mxu0 %v340
  %468 = vmatprep.subr.bf16.mxu0 0
  %469 = vmatpush1.bf16.msra.mxu0 %v341
  %470 = vmatprep.subr.bf16.mxu0 0
  %471 = vmatpush1.bf16.msra.mxu0 %v342
  %472 = vmatprep.subr.bf16.mxu0 0
  %473 = vmatpush1.bf16.msra.mxu0 %v343
  %474 = vmatprep.subr.bf16.mxu0 0
  %475 = vmatpush1.bf16.msra.mxu0 %v344
  %476 = vmatprep.subr.bf16.mxu0 0
  %477 = vmatpush1.bf16.msra.mxu0 %v345
  %478 = vmatprep.subr.bf16.mxu0 0
  %479 = vmatpush1.bf16.msra.mxu0 %v346
  %480 = vmatprep.subr.bf16.mxu0 0
  %481 = vmatpush1.bf16.msra.mxu0 %v347
  %482 = vmatprep.subr.bf16.mxu0 0
  %483 = vmatpush1.bf16.msra.mxu0 %v348
  %484 = vmatprep.subr.bf16.mxu0 0
  %485 = vmatpush1.bf16.msra.mxu0 %v349
  %486 = vmatprep.mubr.bf16.mxu0 %v27
  %487 = vmatmul.mubr.bf16.gmra.mrb[0].mxu0 %v26
  %v488 = vpop.f32.mrb[0].mxu0
  %v489 = vadd.f32 %v449, %v488
  %v490 = vpop.f32.mrb[0].mxu0
  %v491 = vpop.f32.mrb[0].mxu0
  %v492 = vpop.f32.mrb[0].mxu0
  %493 = vdwg.mxu0
  %494 = vmatprep.subr.bf16.mxu0 0
  %495 = vmatpush1.bf16.msra.mxu0 %v350
  %496 = vmatprep.subr.bf16.mxu0 0
  %497 = vmatpush1.bf16.msra.mxu0 %v351
  %498 = vmatprep.subr.bf16.mxu0 0
  %499 = vmatpush1.bf16.msra.mxu0 %v352
  %500 = vmatprep.subr.bf16.mxu0 0
  %501 = vmatpush1.bf16.msra.mxu0 %v353
  %502 = vmatprep.subr.bf16.mxu0 0
  %503 = vmatpush1.bf16.msra.mxu0 %v354
  %504 = vmatprep.subr.bf16.mxu0 0
  %505 = vmatpush1.bf16.msra.mxu0 %v355
  %506 = vmatprep.subr.bf16.mxu0 0
  %507 = vmatpush1.bf16.msra.mxu0 %v356
  %508 = vmatprep.subr.bf16.mxu0 0
  %509 = vmatpush1.bf16.msra.mxu0 %v357
  %510 = vmatprep.subr.bf16.mxu0 0
  %511 = vmatpush1.bf16.msra.mxu0 %v358
  %512 = vmatprep.subr.bf16.mxu0 0
  %513 = vmatpush1.bf16.msra.mxu0 %v359
  %514 = vmatprep.subr.bf16.mxu0 0
  %515 = vmatpush1.bf16.msra.mxu0 %v360
  %516 = vmatprep.subr.bf16.mxu0 0
  %517 = vmatpush1.bf16.msra.mxu0 %v361
  %518 = vmatprep.subr.bf16.mxu0 0
  %519 = vmatpush1.bf16.msra.mxu0 %v362
  %520 = vmatprep.subr.bf16.mxu0 0
  %521 = vmatpush1.bf16.msra.mxu0 %v363
  %522 = vmatprep.subr.bf16.mxu0 0
  %523 = vmatpush1.bf16.msra.mxu0 %v364
  %524 = vmatprep.subr.bf16.mxu0 0
  %525 = vmatpush1.bf16.msra.mxu0 %v365
  %526 = vmatprep.mubr.bf16.mxu0 %v29
  %527 = vmatmul.mubr.bf16.gmra.mrb[0].mxu0 %v28
  %v528 = vpop.f32.mrb[0].mxu0
  %v529 = vadd.f32 %v489, %v528
  %v530 = vpop.f32.mrb[0].mxu0
  %v531 = vpop.f32.mrb[0].mxu0
  %v532 = vpop.f32.mrb[0].mxu0
  %533 = vdwg.mxu0
  %v534 = vld [vmem:[%s3] sm:$0xff]
  %536 = vset.pattern.permute.xlu0 0
  %537 = vperm.xlu0 %536, %v534
  %v538 = vpop.permute.xlu0 %537
  %v540 = vmul.f32 %v529, %v538
  %v541 = vlaneseq
  %v542 = vshrl.u32 %v541, 7
  %v543 = vlaneseq
  %v544 = vand.u32 %v543, 127
  %v545 = vmul.u32 %v542, 4
  %vm546 = vcmp.ge.s32.totalorder %v544, %v545
  %v547 = vadd.s32 %v542, 1
  %v548 = vmul.u32 %v547, 4
  %vm549 = vcmp.lt.s32.totalorder %v544, %v548
  %vm550 = vmand %vm546, %vm549
  %v551 = vsel %vm550, 1.0, 0.0
  %vm552 = vcmask 64512
  %v554 = vsel %vm552, %v551, 0
  %556 = vmatprep.subr.mxu0 0.0
  %557 = vmatpush1.msra.mxu0 %v540
  %558 = vmatprep.subr.mxu0 0.0
  %559 = vmatpush1.msra.mxu0 0.0
  %560 = vmatprep.subr.mxu0 0.0
  %561 = vmatpush1.msra.mxu0 0.0
  %562 = vmatprep.subr.mxu0 0.0
  %563 = vmatpush1.msra.mxu0 0.0
  %564 = vmatprep.subr.mxu0 0.0
  %565 = vmatpush1.msra.mxu0 0.0
  %566 = vmatprep.subr.mxu0 0.0
  %567 = vmatpush1.msra.mxu0 0.0
  %568 = vmatprep.subr.mxu0 0.0
  %569 = vmatpush1.msra.mxu0 0.0
  %570 = vmatprep.subr.mxu0 0.0
  %571 = vmatpush1.msra.mxu0 0.0
  %572 = vmatprep.subr.mxu0 0.0
  %573 = vmatpush1.msra.mxu0 0.0
  %574 = vmatprep.subr.mxu0 0.0
  %575 = vmatpush1.msra.mxu0 0.0
  %576 = vmatprep.subr.mxu0 0.0
  %577 = vmatpush1.msra.mxu0 0.0
  %578 = vmatprep.subr.mxu0 0.0
  %579 = vmatpush1.msra.mxu0 0.0
  %580 = vmatprep.subr.mxu0 0.0
  %581 = vmatpush1.msra.mxu0 0.0
  %582 = vmatprep.subr.mxu0 0.0
  %583 = vmatpush1.msra.mxu0 0.0
  %584 = vmatprep.subr.mxu0 0.0
  %585 = vmatpush1.msra.mxu0 0.0
  %586 = vmatprep.subr.mxu0 0.0
  %587 = vmatpush1.msra.mxu0 0.0
  %588 = vmatprep.subr.mxu0 0.0
  %589 = vmatpush1.msra.mxu0 0.0
  %590 = vmatprep.subr.mxu0 0.0
  %591 = vmatpush1.msra.mxu0 0.0
  %592 = vmatprep.subr.mxu0 0.0
  %593 = vmatpush1.msra.mxu0 0.0
  %594 = vmatprep.subr.mxu0 0.0
  %595 = vmatpush1.msra.mxu0 0.0
  %596 = vmatprep.subr.mxu0 0.0
  %597 = vmatpush1.msra.mxu0 0.0
  %598 = vmatprep.subr.mxu0 0.0
  %599 = vmatpush1.msra.mxu0 0.0
  %600 = vmatprep.subr.mxu0 0.0
  %601 = vmatpush1.msra.mxu0 0.0
  %602 = vmatprep.subr.mxu0 0.0
  %603 = vmatpush1.msra.mxu0 0.0
  %604 = vmatprep.subr.mxu0 0.0
  %605 = vmatpush1.msra.mxu0 0.0
  %606 = vmatprep.subr.mxu0 0.0
  %607 = vmatpush1.msra.mxu0 0.0
  %608 = vmatprep.subr.mxu0 0.0
  %609 = vmatpush1.msra.mxu0 0.0
  %610 = vmatprep.subr.mxu0 0.0
  %611 = vmatpush1.msra.mxu0 0.0
  %612 = vmatprep.subr.mxu0 0.0
  %613 = vmatpush1.msra.mxu0 0.0
  %614 = vmatprep.subr.mxu0 0.0
  %615 = vmatpush1.msra.mxu0 0.0
  %616 = vmatprep.subr.mxu0 0.0
  %617 = vmatpush1.msra.mxu0 0.0
  %618 = vmatprep.subr.mxu0 0.0
  %619 = vmatpush1.msra.mxu0 0.0
  %620 = vmatprep.mubr.f32.mxu0 0.0
  %621 = vmatmul.mubr.f32.gmra.mrb[0].mxu0 %v554
  %v622 = vpop.f32.mrb[0].mxu0
  %v623 = vadd.f32 0.0, %v622
  %v624 = vpop.f32.mrb[0].mxu0
  %625 = vdwg.mxu0
  %v626 = vld [vmem:[%s2] sm:$0xff]
  %v627 = vld [vmem:[%s2 + $0x8] sm:$0xff]
  %v628 = vld [vmem:[%s2 + $0x10] sm:$0xff]
  %v629 = vld [vmem:[%s2 + $0x18] sm:$0xff]
  %v630 = vld [vmem:[%s2 + $0x20] sm:$0xff]
  %v631 = vld [vmem:[%s2 + $0x28] sm:$0xff]
  %v632 = vld [vmem:[%s2 + $0x30] sm:$0xff]
  %v633 = vld [vmem:[%s2 + $0x38] sm:$0xff]
  %v634 = vld [vmem:[%s2 + $0x40] sm:$0xff]
  %v635 = vld [vmem:[%s2 + $0x48] sm:$0xff]
  %v636 = vld [vmem:[%s2 + $0x50] sm:$0xff]
  %v637 = vld [vmem:[%s2 + $0x58] sm:$0xff]
  %v638 = vld [vmem:[%s2 + $0x60] sm:$0xff]
  %v639 = vld [vmem:[%s2 + $0x68] sm:$0xff]
  %v640 = vld [vmem:[%s2 + $0x70] sm:$0xff]
  %v641 = vld [vmem:[%s2 + $0x78] sm:$0xff]
  %642 = vmatprep.subr.mxu0 0.0
  %643 = vmatpush1.msra.mxu0 %v626
  %644 = vmatprep.subr.mxu0 0.0
  %645 = vmatpush1.msra.mxu0 %v627
  %646 = vmatprep.subr.mxu0 0.0
  %647 = vmatpush1.msra.mxu0 %v628
  %648 = vmatprep.subr.mxu0 0.0
  %649 = vmatpush1.msra.mxu0 %v629
  %650 = vmatprep.subr.mxu0 0.0
  %651 = vmatpush1.msra.mxu0 %v630
  %652 = vmatprep.subr.mxu0 0.0
  %653 = vmatpush1.msra.mxu0 %v631
  %654 = vmatprep.subr.mxu0 0.0
  %655 = vmatpush1.msra.mxu0 %v632
  %656 = vmatprep.subr.mxu0 0.0
  %657 = vmatpush1.msra.mxu0 %v633
  %658 = vmatprep.subr.mxu0 0.0
  %659 = vmatpush1.msra.mxu0 %v634
  %660 = vmatprep.subr.mxu0 0.0
  %661 = vmatpush1.msra.mxu0 %v635
  %662 = vmatprep.subr.mxu0 0.0
  %663 = vmatpush1.msra.mxu0 %v636
  %664 = vmatprep.subr.mxu0 0.0
  %665 = vmatpush1.msra.mxu0 %v637
  %666 = vmatprep.subr.mxu0 0.0
  %667 = vmatpush1.msra.mxu0 %v638
  %668 = vmatprep.subr.mxu0 0.0
  %669 = vmatpush1.msra.mxu0 %v639
  %670 = vmatprep.subr.mxu0 0.0
  %671 = vmatpush1.msra.mxu0 %v640
  %672 = vmatprep.subr.mxu0 0.0
  %673 = vmatpush1.msra.mxu0 %v641
  %674 = vmatprep.subr.mxu0 0.0
  %675 = vmatpush1.msra.mxu0 0.0
  %676 = vmatprep.subr.mxu0 0.0
  %677 = vmatpush1.msra.mxu0 0.0
  %678 = vmatprep.subr.mxu0 0.0
  %679 = vmatpush1.msra.mxu0 0.0
  %680 = vmatprep.subr.mxu0 0.0
  %681 = vmatpush1.msra.mxu0 0.0
  %682 = vmatprep.subr.mxu0 0.0
  %683 = vmatpush1.msra.mxu0 0.0
  %684 = vmatprep.subr.mxu0 0.0
  %685 = vmatpush1.msra.mxu0 0.0
  %686 = vmatprep.subr.mxu0 0.0
  %687 = vmatpush1.msra.mxu0 0.0
  %688 = vmatprep.subr.mxu0 0.0
  %689 = vmatpush1.msra.mxu0 0.0
  %690 = vmatprep.subr.mxu0 0.0
  %691 = vmatpush1.msra.mxu0 0.0
  %692 = vmatprep.subr.mxu0 0.0
  %693 = vmatpush1.msra.mxu0 0.0
  %694 = vmatprep.subr.mxu0 0.0
  %695 = vmatpush1.msra.mxu0 0.0
  %696 = vmatprep.subr.mxu0 0.0
  %697 = vmatpush1.msra.mxu0 0.0
  %698 = vmatprep.subr.mxu0 0.0
  %699 = vmatpush1.msra.mxu0 0.0
  %700 = vmatprep.subr.mxu0 0.0
  %701 = vmatpush1.msra.mxu0 0.0
  %702 = vmatprep.subr.mxu0 0.0
  %703 = vmatpush1.msra.mxu0 0.0
  %704 = vmatprep.subr.mxu0 0.0
  %705 = vmatpush1.msra.mxu0 0.0
  %706 = vmatprep.mubr.f32.mxu0 0.0
  %707 = vmatmul.mubr.f32.gmra.mrb[0].mxu0 %v623
  %v708 = vpop.f32.mrb[0].mxu0
  %v709 = vadd.f32 0.0, %v708
  %v710 = vpop.f32.mrb[0].mxu0
  %711 = vdwg.mxu0
  %712 = vst [vmem:[%s4] sm:$0x3] %v709
  // Predicated region
  $region18: #{tir_forward.4} parent=0 // pred_check
    _
  $region19: #{tir_forward.4} parent=0 // pred_check_branch
    %714 = sbr.rel (0) target = $region21
  $region20: #{tir_forward.4} parent=0 // pred_region
    _
  $region21: #{tir_forward.4} parent=0 // pred_fallthru
    _
  // Predicated region
  $region22: #{tir_forward.4} parent=0 // pred_check
    _
  $region23: #{tir_forward.4} parent=0 // pred_check_branch
    %716 = sbr.rel (0) target = $region25
  $region24: #{tir_forward.4} parent=0 // pred_region
    _
  $region25: #{tir_forward.4} parent=0 // pred_fallthru
    _

</llo_original>
